<compile_context>
chip_gen: v5e
topology: v5e:2x2
jax: 0.10.0
libtpu: 0.0.40
codegen_flags: <defaults>
</compile_context>

<pallas_src>
import jax
import jax.numpy as jnp
from jax.experimental import pallas as pl
from jax.experimental.pallas import tpu as pltpu

KT = 9    # temporal kernel size (9, 1)
PAD = 4   # temporal padding (4, 0)


def _round_up(v, m):
    return (v + m - 1) // m * m


# ---------------------------------------------------------------------------
# Wrapper + fused kernel
# ---------------------------------------------------------------------------
def spatial_temporal_layer(x, edge_index, params, t_tile=4):
    """x: [B, T, N, Cin] float32. edge_index: [2, E] int32. Returns ([B, T, N, Cout], edge_index)."""
    B, T, N, Cin = x.shape
    Cout = params["wg"].shape[1]
    Cmid = params["w1"].shape[1]
    f32, bf16 = jnp.float32, jnp.bfloat16

    assert T % t_tile == 0, "t_tile must divide T"
    Tt = t_tile                      # output frames per grid step (halo recompute ratio = (Tt+8)/Tt)
    num_tt = T // Tt
    F = Tt + 2 * PAD                 # frames per step incl. temporal halo
    Np = _round_up(N, 16)            # sublane-align node dim (bf16 tile = 16 rows)

    # Dense GCN-normalized adjacency for one frame, zero-padded to Np (padded node rows/cols are 0,
    # so padded rows only carry junk that is sliced off at the end).
    ahat = gcn_norm_dense(edge_index, N)
    ahat_p = jnp.zeros((Np, Np), f32).at[:N, :N].set(ahat)

    # Fold inference BatchNorms into the adjacent conv weights / biases (wrapper-side, free).
    wg = params["wg"] * params["s1"]                                     # GCN linear  (+ tcn BN1)
    bg = params["bg"] * params["s1"] + params["t1"]
    wr = params["wr"] * params["sr"]                                     # residual    (+ BN)
    rb = params["rb"] * params["sr"] + params["tr"]
    wcat = jnp.concatenate([wg, wr], axis=1).astype(bf16)                # fused [Cin, 2*Cout]
    w1 = (params["w1"] * params["s2"]).astype(bf16)                      # tcn 1x1     (+ BN2)
    c1b = params["c1b"] * params["s2"] + params["t2"]
    wtf = (params["wt"] * params["s3"]).reshape(KT * Cmid, Cmid).astype(bf16)  # (9,1) im2col (+ BN3)
    tb = params["tb"] * params["s3"] + params["t3"]
    w3 = (params["w3"] * params["s4"]).astype(bf16)                      # tcn 1x1     (+ BN4)
    c3b = params["c3b"] * params["s4"] + params["t4"]

    # Overlapping T-tile windows with a PAD-frame halo each side (Cin is tiny, duplication is cheap).
    x_pad = jnp.pad(x, ((0, 0), (PAD, PAD), (0, Np - N), (0, 0)))        # [B, T+2*PAD, Np, Cin]
    x_exp = jnp.stack([x_pad[:, i * Tt:i * Tt + F] for i in range(num_tt)], axis=1)
    x_exp = x_exp.reshape(B, num_tt, F * Np, Cin).astype(bf16)           # flat, channels-last

    def kernel(x_ref, ahat_ref, wcat_ref, bg_ref, w1_ref, c1b_ref,
               wtf_ref, tb_ref, w3_ref, c3b_ref, rb_ref, out_ref):
        tt = pl.program_id(1)
        x2 = x_ref[0, 0]                                                 # [F*Np, Cin] bf16

        # ---- GCN projection + residual 1x1 share LHS x -> one fused dot ----
        xw = jnp.dot(x2, wcat_ref[...], preferred_element_type=f32)     # [F*Np, 2*Cout]
        xwg = xw[:, :Cout]
        r = xw[PAD * Np:(PAD + Tt) * Np, Cout:] + rb_ref[...]           # residual, output frames only

        # ---- spatial aggregation: per-frame [Np,Np] @ [Np,Cout] dots (f32 for accuracy) ----
        ahat_v = ahat_ref[...]
        so = jnp.concatenate(
            [jnp.dot(ahat_v, xwg[f * Np:(f + 1) * Np, :], preferred_element_type=f32)
             for f in range(F)], axis=0) + bg_ref[...]                  # [F*Np, Cout]

        # ---- tcn: (BN1 folded) -> ReLU -> 1x1 Cout->Cmid (+BN2) -> ReLU ----
        h = jnp.maximum(so, 0.0)
        h = jnp.dot(h.astype(bf16), w1_ref[...], preferred_element_type=f32) + c1b_ref[...]
        h = jnp.maximum(h, 0.0)                                          # [F*Np, Cmid]

        # ---- halo frames outside [0, T) are the temporal zero-padding: mask to 0 ----
        lo = jnp.maximum(0, PAD - tt * Tt)                               # first valid local frame
        hi = jnp.minimum(F, T + PAD - tt * Tt)                           # one-past-last valid frame
        row = jax.lax.broadcasted_iota(jnp.int32, (F * Np, 1), 0)
        h = jnp.where((row >= lo * Np) & (row < hi * Np), h, 0.0)
        hb = h.astype(bf16)

        # ---- (9,1) temporal conv as ONE im2col matmul (K = KT*Cmid) ----
        slab = jnp.concatenate(
            [hb[k * Np:k * Np + Tt * Np, :] for k in range(KT)], axis=1)  # [Tt*Np, KT*Cmid]
        h = jnp.dot(slab, wtf_ref[...], preferred_element_type=f32) + tb_ref[...]

        # ---- (BN3 folded) -> ReLU -> 1x1 Cmid->Cout (+BN4) -> +residual -> ReLU ----
        h = jnp.maximum(h, 0.0)
        h = jnp.dot(h.astype(bf16), w3_ref[...], preferred_element_type=f32) + c3b_ref[...]
        out_ref[0, 0] = jnp.maximum(h + r, 0.0).astype(out_ref.dtype)

    weights = [ahat_p, wcat, bg, w1, c1b, wtf, tb, w3, c3b, rb]

    def full_spec(a):
        nd = a.ndim
        return pl.BlockSpec(a.shape, lambda b, t, _nd=nd: (0,) * _nd)

    in_specs = [pl.BlockSpec((1, 1, F * Np, Cin), lambda b, t: (b, t, 0, 0))] + \
               [full_spec(w) for w in weights]

    # Generation-aware VMEM limit: ~3/4 of physical capacity (≈48 MiB on v7x, ~96-100 MiB on v5e/v6e).
    try:
        vmem_cap = pltpu.get_tpu_info().vmem_capacity_bytes
    except Exception:
        vmem_cap = 64 * 1024 * 1024
    vmem_limit = min(int(vmem_cap * 3 // 4), 100 * 1024 * 1024)

    out_flat = pl.pallas_call(
        kernel,
        out_shape=jax.ShapeDtypeStruct((B, num_tt, Tt * Np, Cout), x.dtype),
        grid_spec=pltpu.PrefetchScalarGridSpec(
            num_scalar_prefetch=0,
            grid=(B, num_tt),
            in_specs=in_specs,
            out_specs=pl.BlockSpec((1, 1, Tt * Np, Cout), lambda b, t: (b, t, 0, 0)),
        ),
        compiler_params=pltpu.CompilerParams(
            dimension_semantics=("parallel", "parallel"),   # batch x T-tiles across TensorCores
            vmem_limit_bytes=vmem_limit,
        ),
    )(x_exp, *weights)

    out = out_flat.reshape(B, T, Np, Cout)[:, :, :N, :]
    return out, edge_index


# ---------------------------------------------------------------------------
# Glue: GCN normalization (dense A_hat = D^-1/2 (A + I) D^-1/2), param init, reference.
# ---------------------------------------------------------------------------
def gcn_norm_dense(edge_index, num_nodes):
    src, dst = edge_index[0], edge_index[1]
    A = jnp.zeros((num_nodes, num_nodes), jnp.float32)
    A = A.at[dst, src].add(1.0)                      # message src -> dst (source_to_target flow)
    A = A + jnp.eye(num_nodes, dtype=jnp.float32)    # self loops
    deg = A.sum(axis=1)
    dinv = jax.lax.rsqrt(deg)
    return dinv[:, None] * A * dinv[None, :]


def init_params(key, Cin, Cout, h=2):
    Cmid = Cout // h
    ks = jax.random.split(key, 16)

    def w(k, shape, scale):
        return scale * jax.random.normal(k, shape, jnp.float32)

    def bn(k, C):
        k1, k2, k3, k4 = jax.random.split(k, 4)
        gamma = 1.0 + 0.1 * jax.random.normal(k1, (1, C), jnp.float32)
        beta = 0.1 * jax.random.normal(k2, (1, C), jnp.float32)
        mean = 0.1 * jax.random.normal(k3, (1, C), jnp.float32)
        var = 1.0 + 0.1 * jax.random.uniform(k4, (1, C), jnp.float32)
        scale = gamma * jax.lax.rsqrt(var + 1e-5)
        shift = beta - mean * scale
        return scale, shift

    p = {}
    p["wg"] = w(ks[0], (Cin, Cout), 0.3)            # GCNConv linear weight (transposed)
    p["bg"] = w(ks[1], (1, Cout), 0.1)              # GCNConv bias
    p["s1"], p["t1"] = bn(ks[2], Cout)              # tcn BN1
    p["w1"] = w(ks[3], (Cout, Cmid), 0.2)           # tcn 1x1 conv
    p["c1b"] = w(ks[4], (1, Cmid), 0.1)
    p["s2"], p["t2"] = bn(ks[5], Cmid)              # tcn BN2
    p["wt"] = w(ks[6], (KT, Cmid, Cmid), 0.1)       # tcn (9,1) conv, wt[k][ci, co]
    p["tb"] = w(ks[7], (1, Cmid), 0.1)
    p["s3"], p["t3"] = bn(ks[8], Cmid)              # tcn BN3
    p["w3"] = w(ks[9], (Cmid, Cout), 0.2)           # tcn 1x1 conv
    p["c3b"] = w(ks[10], (1, Cout), 0.1)
    p["s4"], p["t4"] = bn(ks[11], Cout)             # tcn BN4
    p["wr"] = w(ks[12], (Cin, Cout), 0.3)           # residual 1x1 conv
    p["rb"] = w(ks[13], (1, Cout), 0.1)
    p["sr"], p["tr"] = bn(ks[14], Cout)             # residual BN
    return p


def reference(x, ahat, p):
    B, T, N, Cin = x.shape
    xw = jnp.einsum("btnc,cd->btnd", x, p["wg"])
    so = jnp.einsum("mn,btnd->btmd", ahat, xw) + p["bg"]
    h = jnp.maximum(so * p["s1"] + p["t1"], 0.0)
    h = jnp.einsum("btnc,cd->btnd", h, p["w1"]) + p["c1b"]
    h = jnp.maximum(h * p["s2"] + p["t2"], 0.0)
    hp = jnp.pad(h, ((0, 0), (PAD, PAD), (0, 0), (0, 0)))
    acc = jnp.zeros_like(h) + p["tb"]
    for k in range(KT):
        acc = acc + jnp.einsum("btnc,cd->btnd", hp[:, k:k + T], p["wt"][k])
    h = jnp.maximum(acc * p["s3"] + p["t3"], 0.0)
    h = jnp.einsum("btnc,cd->btnd", h, p["w3"]) + p["c3b"]
    h = h * p["s4"] + p["t4"]
    r = jnp.einsum("btnc,cd->btnd", x, p["wr"]) + p["rb"]
    r = r * p["sr"] + p["tr"]
    return jnp.maximum(h + r, 0.0)


if __name__ == "__main__":
    B, T, N, Cin, Cout = 2, 8, 16, 4, 32
    key = jax.random.PRNGKey(0)
    kx, kp = jax.random.split(key)

    x = jax.random.normal(kx, (B, T, N, Cin), jnp.float32)

    # ring graph over N nodes (both directions), edge_index: [2, E]
    src = jnp.arange(N, dtype=jnp.int32)
    dst = (src + 1) % N
    edge_index = jnp.stack([jnp.concatenate([src, dst]),
                            jnp.concatenate([dst, src])], axis=0)

    params = init_params(kp, Cin, Cout, h=2)

    out, adj_out = spatial_temporal_layer(x, edge_index, params, t_tile=4)
    out = jax.block_until_ready(out)

    ref = reference(x, gcn_norm_dense(edge_index, N), params)
    assert out.shape == (B, T, N, Cout)
    # bf16 MXU inputs (f32 accumulation, f32 spatial aggregation) vs. a pure-f32 reference.
    if not jnp.allclose(out, ref, atol=5e-2, rtol=5e-2):
        raise AssertionError("Pallas kernel does not match JAX reference")
    print("KERNEL_OK")
</pallas_src>

<mosaic_0001>
module attributes {stable_mosaic.version = 11 : i64} {
  func.func @kernel(%arg0: i32, %arg1: i32, %arg2: memref<1x1x192x4xbf16, #tpu.memory_space<vmem>>, %arg3: memref<16x16xf32, #tpu.memory_space<vmem>>, %arg4: memref<4x64xbf16, #tpu.memory_space<vmem>>, %arg5: memref<1x32xf32, #tpu.memory_space<vmem>>, %arg6: memref<32x16xbf16, #tpu.memory_space<vmem>>, %arg7: memref<1x16xf32, #tpu.memory_space<vmem>>, %arg8: memref<144x16xbf16, #tpu.memory_space<vmem>>, %arg9: memref<1x16xf32, #tpu.memory_space<vmem>>, %arg10: memref<16x32xbf16, #tpu.memory_space<vmem>>, %arg11: memref<1x32xf32, #tpu.memory_space<vmem>>, %arg12: memref<1x32xf32, #tpu.memory_space<vmem>>, %arg13: memref<1x1x64x32xf32, #tpu.memory_space<vmem>>) attributes {dimension_semantics = [#tpu.dimension_semantics<parallel>, #tpu.dimension_semantics<parallel>], iteration_bounds = array<i64: 2, 2>, scalar_prefetch = 0 : i64, scratch_operands = 0 : i64, tpu.core_type = #tpu.core_type<tc>, window_params = [{transform_indices = @transform_0, window_bounds = array<i64: 1, 1, 192, 4>}, {pipeline_mode = #tpu.pipeline_mode<synchronous>, transform_indices = @transform_1, window_bounds = array<i64: 16, 16>}, {pipeline_mode = #tpu.pipeline_mode<synchronous>, transform_indices = @transform_2, window_bounds = array<i64: 4, 64>}, {pipeline_mode = #tpu.pipeline_mode<synchronous>, transform_indices = @transform_3, window_bounds = array<i64: 1, 32>}, {pipeline_mode = #tpu.pipeline_mode<synchronous>, transform_indices = @transform_4, window_bounds = array<i64: 32, 16>}, {pipeline_mode = #tpu.pipeline_mode<synchronous>, transform_indices = @transform_5, window_bounds = array<i64: 1, 16>}, {pipeline_mode = #tpu.pipeline_mode<synchronous>, transform_indices = @transform_6, window_bounds = array<i64: 144, 16>}, {pipeline_mode = #tpu.pipeline_mode<synchronous>, transform_indices = @transform_7, window_bounds = array<i64: 1, 16>}, {pipeline_mode = #tpu.pipeline_mode<synchronous>, transform_indices = @transform_8, window_bounds = array<i64: 16, 32>}, {pipeline_mode = #tpu.pipeline_mode<synchronous>, transform_indices = @transform_9, window_bounds = array<i64: 1, 32>}, {pipeline_mode = #tpu.pipeline_mode<synchronous>, transform_indices = @transform_10, window_bounds = array<i64: 1, 32>}, {transform_indices = @transform_11, window_bounds = array<i64: 1, 1, 64, 32>}]} {
    %c0 = arith.constant 0 : index
    %c0_0 = arith.constant 0 : index
    %c0_1 = arith.constant 0 : index
    %c0_2 = arith.constant 0 : index
    %0 = vector.load %arg2[%c0, %c0_0, %c0_1, %c0_2] : memref<1x1x192x4xbf16, #tpu.memory_space<vmem>>, vector<1x1x192x4xbf16>
    %1 = vector.shape_cast %0 : vector<1x1x192x4xbf16> to vector<192x4xbf16>
    %c0_3 = arith.constant 0 : index
    %c0_4 = arith.constant 0 : index
    %2 = vector.load %arg4[%c0_3, %c0_4] : memref<4x64xbf16, #tpu.memory_space<vmem>>, vector<4x64xbf16>
    %cst = arith.constant dense<0.000000e+00> : vector<192x64xf32>
    %3 = tpu.matmul %1, %2, %cst {dimension_numbers = #tpu.dot_dimension_numbers<[1], [0], [0], [1], [0, 0, 1, 1], [], []>} : vector<192x4xbf16>, vector<4x64xbf16>, vector<192x64xf32> -> vector<192x64xf32>
    %4 = vector.extract_strided_slice %3 {offsets = [0, 0], sizes = [192, 32], strides = [1, 1]} : vector<192x64xf32> to vector<192x32xf32>
    %5 = vector.extract_strided_slice %3 {offsets = [64, 32], sizes = [64, 32], strides = [1, 1]} : vector<192x64xf32> to vector<64x32xf32>
    %c0_5 = arith.constant 0 : index
    %c0_6 = arith.constant 0 : index
    %6 = vector.load %arg12[%c0_5, %c0_6] : memref<1x32xf32, #tpu.memory_space<vmem>>, vector<1x32xf32>
    %7 = vector.broadcast %6 : vector<1x32xf32> to vector<64x32xf32>
    %8 = arith.addf %5, %7 : vector<64x32xf32>
    %c0_7 = arith.constant 0 : index
    %c0_8 = arith.constant 0 : index
    %9 = vector.load %arg3[%c0_7, %c0_8] : memref<16x16xf32, #tpu.memory_space<vmem>>, vector<16x16xf32>
    %10 = vector.extract_strided_slice %4 {offsets = [0, 0], sizes = [16, 32], strides = [1, 1]} : vector<192x32xf32> to vector<16x32xf32>
    %cst_9 = arith.constant dense<0.000000e+00> : vector<16x32xf32>
    %11 = tpu.matmul %9, %10, %cst_9 {dimension_numbers = #tpu.dot_dimension_numbers<[1], [0], [0], [1], [0, 0, 1, 1], [], []>} : vector<16x16xf32>, vector<16x32xf32>, vector<16x32xf32> -> vector<16x32xf32>
    %12 = vector.extract_strided_slice %4 {offsets = [16, 0], sizes = [16, 32], strides = [1, 1]} : vector<192x32xf32> to vector<16x32xf32>
    %cst_10 = arith.constant dense<0.000000e+00> : vector<16x32xf32>
    %13 = tpu.matmul %9, %12, %cst_10 {dimension_numbers = #tpu.dot_dimension_numbers<[1], [0], [0], [1], [0, 0, 1, 1], [], []>} : vector<16x16xf32>, vector<16x32xf32>, vector<16x32xf32> -> vector<16x32xf32>
    %14 = vector.extract_strided_slice %4 {offsets = [32, 0], sizes = [16, 32], strides = [1, 1]} : vector<192x32xf32> to vector<16x32xf32>
    %cst_11 = arith.constant dense<0.000000e+00> : vector<16x32xf32>
    %15 = tpu.matmul %9, %14, %cst_11 {dimension_numbers = #tpu.dot_dimension_numbers<[1], [0], [0], [1], [0, 0, 1, 1], [], []>} : vector<16x16xf32>, vector<16x32xf32>, vector<16x32xf32> -> vector<16x32xf32>
    %16 = vector.extract_strided_slice %4 {offsets = [48, 0], sizes = [16, 32], strides = [1, 1]} : vector<192x32xf32> to vector<16x32xf32>
    %cst_12 = arith.constant dense<0.000000e+00> : vector<16x32xf32>
    %17 = tpu.matmul %9, %16, %cst_12 {dimension_numbers = #tpu.dot_dimension_numbers<[1], [0], [0], [1], [0, 0, 1, 1], [], []>} : vector<16x16xf32>, vector<16x32xf32>, vector<16x32xf32> -> vector<16x32xf32>
    %18 = vector.extract_strided_slice %4 {offsets = [64, 0], sizes = [16, 32], strides = [1, 1]} : vector<192x32xf32> to vector<16x32xf32>
    %cst_13 = arith.constant dense<0.000000e+00> : vector<16x32xf32>
    %19 = tpu.matmul %9, %18, %cst_13 {dimension_numbers = #tpu.dot_dimension_numbers<[1], [0], [0], [1], [0, 0, 1, 1], [], []>} : vector<16x16xf32>, vector<16x32xf32>, vector<16x32xf32> -> vector<16x32xf32>
    %20 = vector.extract_strided_slice %4 {offsets = [80, 0], sizes = [16, 32], strides = [1, 1]} : vector<192x32xf32> to vector<16x32xf32>
    %cst_14 = arith.constant dense<0.000000e+00> : vector<16x32xf32>
    %21 = tpu.matmul %9, %20, %cst_14 {dimension_numbers = #tpu.dot_dimension_numbers<[1], [0], [0], [1], [0, 0, 1, 1], [], []>} : vector<16x16xf32>, vector<16x32xf32>, vector<16x32xf32> -> vector<16x32xf32>
    %22 = vector.extract_strided_slice %4 {offsets = [96, 0], sizes = [16, 32], strides = [1, 1]} : vector<192x32xf32> to vector<16x32xf32>
    %cst_15 = arith.constant dense<0.000000e+00> : vector<16x32xf32>
    %23 = tpu.matmul %9, %22, %cst_15 {dimension_numbers = #tpu.dot_dimension_numbers<[1], [0], [0], [1], [0, 0, 1, 1], [], []>} : vector<16x16xf32>, vector<16x32xf32>, vector<16x32xf32> -> vector<16x32xf32>
    %24 = vector.extract_strided_slice %4 {offsets = [112, 0], sizes = [16, 32], strides = [1, 1]} : vector<192x32xf32> to vector<16x32xf32>
    %cst_16 = arith.constant dense<0.000000e+00> : vector<16x32xf32>
    %25 = tpu.matmul %9, %24, %cst_16 {dimension_numbers = #tpu.dot_dimension_numbers<[1], [0], [0], [1], [0, 0, 1, 1], [], []>} : vector<16x16xf32>, vector<16x32xf32>, vector<16x32xf32> -> vector<16x32xf32>
    %26 = vector.extract_strided_slice %4 {offsets = [128, 0], sizes = [16, 32], strides = [1, 1]} : vector<192x32xf32> to vector<16x32xf32>
    %cst_17 = arith.constant dense<0.000000e+00> : vector<16x32xf32>
    %27 = tpu.matmul %9, %26, %cst_17 {dimension_numbers = #tpu.dot_dimension_numbers<[1], [0], [0], [1], [0, 0, 1, 1], [], []>} : vector<16x16xf32>, vector<16x32xf32>, vector<16x32xf32> -> vector<16x32xf32>
    %28 = vector.extract_strided_slice %4 {offsets = [144, 0], sizes = [16, 32], strides = [1, 1]} : vector<192x32xf32> to vector<16x32xf32>
    %cst_18 = arith.constant dense<0.000000e+00> : vector<16x32xf32>
    %29 = tpu.matmul %9, %28, %cst_18 {dimension_numbers = #tpu.dot_dimension_numbers<[1], [0], [0], [1], [0, 0, 1, 1], [], []>} : vector<16x16xf32>, vector<16x32xf32>, vector<16x32xf32> -> vector<16x32xf32>
    %30 = vector.extract_strided_slice %4 {offsets = [160, 0], sizes = [16, 32], strides = [1, 1]} : vector<192x32xf32> to vector<16x32xf32>
    %cst_19 = arith.constant dense<0.000000e+00> : vector<16x32xf32>
    %31 = tpu.matmul %9, %30, %cst_19 {dimension_numbers = #tpu.dot_dimension_numbers<[1], [0], [0], [1], [0, 0, 1, 1], [], []>} : vector<16x16xf32>, vector<16x32xf32>, vector<16x32xf32> -> vector<16x32xf32>
    %32 = vector.extract_strided_slice %4 {offsets = [176, 0], sizes = [16, 32], strides = [1, 1]} : vector<192x32xf32> to vector<16x32xf32>
    %cst_20 = arith.constant dense<0.000000e+00> : vector<16x32xf32>
    %33 = tpu.matmul %9, %32, %cst_20 {dimension_numbers = #tpu.dot_dimension_numbers<[1], [0], [0], [1], [0, 0, 1, 1], [], []>} : vector<16x16xf32>, vector<16x32xf32>, vector<16x32xf32> -> vector<16x32xf32>
    %34 = tpu.concatenate %11, %13, %15, %17, %19, %21, %23, %25, %27, %29, %31, %33 in 0 : vector<16x32xf32>, vector<16x32xf32>, vector<16x32xf32>, vector<16x32xf32>, vector<16x32xf32>, vector<16x32xf32>, vector<16x32xf32>, vector<16x32xf32>, vector<16x32xf32>, vector<16x32xf32>, vector<16x32xf32>, vector<16x32xf32> -> vector<192x32xf32>
    %c0_21 = arith.constant 0 : index
    %c0_22 = arith.constant 0 : index
    %35 = vector.load %arg5[%c0_21, %c0_22] : memref<1x32xf32, #tpu.memory_space<vmem>>, vector<1x32xf32>
    %36 = vector.broadcast %35 : vector<1x32xf32> to vector<192x32xf32>
    %37 = arith.addf %34, %36 : vector<192x32xf32>
    %cst_23 = arith.constant 0.000000e+00 : f32
    %38 = vector.broadcast %cst_23 : f32 to vector<192x32xf32>
    %39 = arith.maximumf %37, %38 : vector<192x32xf32>
    %40 = arith.truncf %39 : vector<192x32xf32> to vector<192x32xbf16>
    %c0_24 = arith.constant 0 : index
    %c0_25 = arith.constant 0 : index
    %41 = vector.load %arg6[%c0_24, %c0_25] : memref<32x16xbf16, #tpu.memory_space<vmem>>, vector<32x16xbf16>
    %cst_26 = arith.constant dense<0.000000e+00> : vector<192x16xf32>
    %42 = tpu.matmul %40, %41, %cst_26 {dimension_numbers = #tpu.dot_dimension_numbers<[1], [0], [0], [1], [0, 0, 1, 1], [], []>} : vector<192x32xbf16>, vector<32x16xbf16>, vector<192x16xf32> -> vector<192x16xf32>
    %c0_27 = arith.constant 0 : index
    %c0_28 = arith.constant 0 : index
    %43 = vector.load %arg7[%c0_27, %c0_28] : memref<1x16xf32, #tpu.memory_space<vmem>>, vector<1x16xf32>
    %44 = vector.broadcast %43 : vector<1x16xf32> to vector<192x16xf32>
    %45 = arith.addf %42, %44 : vector<192x16xf32>
    %cst_29 = arith.constant 0.000000e+00 : f32
    %46 = vector.broadcast %cst_29 : f32 to vector<192x16xf32>
    %47 = arith.maximumf %45, %46 : vector<192x16xf32>
    %c4_i32 = arith.constant 4 : i32
    %48 = arith.muli %arg1, %c4_i32 : i32
    %c4_i32_30 = arith.constant 4 : i32
    %49 = arith.subi %c4_i32_30, %48 : i32
    %c0_i32 = arith.constant 0 : i32
    %50 = arith.maxsi %c0_i32, %49 : i32
    %c4_i32_31 = arith.constant 4 : i32
    %51 = arith.muli %arg1, %c4_i32_31 : i32
    %c12_i32 = arith.constant 12 : i32
    %52 = arith.subi %c12_i32, %51 : i32
    %c12_i32_32 = arith.constant 12 : i32
    %53 = arith.minsi %c12_i32_32, %52 : i32
    %54 = tpu.iota {dimensions = array<i32: 0>} : vector<192x1xi32>
    %c16_i32 = arith.constant 16 : i32
    %55 = arith.muli %50, %c16_i32 : i32
    %56 = vector.broadcast %55 : i32 to vector<192x1xi32>
    %57 = arith.cmpi sge, %54, %56 : vector<192x1xi32>
    %c16_i32_33 = arith.constant 16 : i32
    %58 = arith.muli %53, %c16_i32_33 : i32
    %59 = vector.broadcast %58 : i32 to vector<192x1xi32>
    %60 = arith.cmpi slt, %54, %59 : vector<192x1xi32>
    %61 = arith.andi %57, %60 : vector<192x1xi1>
    %cst_34 = arith.constant 0.000000e+00 : f32
    %62 = vector.shape_cast %61 : vector<192x1xi1> to vector<192x1xi1>
    %63 = vector.broadcast %62 : vector<192x1xi1> to vector<192x16xi1>
    %64 = vector.broadcast %cst_34 : f32 to vector<192x16xf32>
    %65 = arith.select %63, %47, %64 : vector<192x16xi1>, vector<192x16xf32>
    %66 = arith.truncf %65 : vector<192x16xf32> to vector<192x16xbf16>
    %67 = vector.extract_strided_slice %66 {offsets = [0, 0], sizes = [64, 16], strides = [1, 1]} : vector<192x16xbf16> to vector<64x16xbf16>
    %68 = vector.extract_strided_slice %66 {offsets = [16, 0], sizes = [64, 16], strides = [1, 1]} : vector<192x16xbf16> to vector<64x16xbf16>
    %69 = vector.extract_strided_slice %66 {offsets = [32, 0], sizes = [64, 16], strides = [1, 1]} : vector<192x16xbf16> to vector<64x16xbf16>
    %70 = vector.extract_strided_slice %66 {offsets = [48, 0], sizes = [64, 16], strides = [1, 1]} : vector<192x16xbf16> to vector<64x16xbf16>
    %71 = vector.extract_strided_slice %66 {offsets = [64, 0], sizes = [64, 16], strides = [1, 1]} : vector<192x16xbf16> to vector<64x16xbf16>
    %72 = vector.extract_strided_slice %66 {offsets = [80, 0], sizes = [64, 16], strides = [1, 1]} : vector<192x16xbf16> to vector<64x16xbf16>
    %73 = vector.extract_strided_slice %66 {offsets = [96, 0], sizes = [64, 16], strides = [1, 1]} : vector<192x16xbf16> to vector<64x16xbf16>
    %74 = vector.extract_strided_slice %66 {offsets = [112, 0], sizes = [64, 16], strides = [1, 1]} : vector<192x16xbf16> to vector<64x16xbf16>
    %75 = vector.extract_strided_slice %66 {offsets = [128, 0], sizes = [64, 16], strides = [1, 1]} : vector<192x16xbf16> to vector<64x16xbf16>
    %76 = tpu.concatenate %67, %68, %69, %70, %71, %72, %73, %74, %75 in 1 : vector<64x16xbf16>, vector<64x16xbf16>, vector<64x16xbf16>, vector<64x16xbf16>, vector<64x16xbf16>, vector<64x16xbf16>, vector<64x16xbf16>, vector<64x16xbf16>, vector<64x16xbf16> -> vector<64x144xbf16>
    %c0_35 = arith.constant 0 : index
    %c0_36 = arith.constant 0 : index
    %77 = vector.load %arg8[%c0_35, %c0_36] : memref<144x16xbf16, #tpu.memory_space<vmem>>, vector<144x16xbf16>
    %cst_37 = arith.constant dense<0.000000e+00> : vector<64x16xf32>
    %78 = tpu.matmul %76, %77, %cst_37 {dimension_numbers = #tpu.dot_dimension_numbers<[1], [0], [0], [1], [0, 0, 1, 1], [], []>} : vector<64x144xbf16>, vector<144x16xbf16>, vector<64x16xf32> -> vector<64x16xf32>
    %c0_38 = arith.constant 0 : index
    %c0_39 = arith.constant 0 : index
    %79 = vector.load %arg9[%c0_38, %c0_39] : memref<1x16xf32, #tpu.memory_space<vmem>>, vector<1x16xf32>
    %80 = vector.broadcast %79 : vector<1x16xf32> to vector<64x16xf32>
    %81 = arith.addf %78, %80 : vector<64x16xf32>
    %cst_40 = arith.constant 0.000000e+00 : f32
    %82 = vector.broadcast %cst_40 : f32 to vector<64x16xf32>
    %83 = arith.maximumf %81, %82 : vector<64x16xf32>
    %84 = arith.truncf %83 : vector<64x16xf32> to vector<64x16xbf16>
    %c0_41 = arith.constant 0 : index
    %c0_42 = arith.constant 0 : index
    %85 = vector.load %arg10[%c0_41, %c0_42] : memref<16x32xbf16, #tpu.memory_space<vmem>>, vector<16x32xbf16>
    %cst_43 = arith.constant dense<0.000000e+00> : vector<64x32xf32>
    %86 = tpu.matmul %84, %85, %cst_43 {dimension_numbers = #tpu.dot_dimension_numbers<[1], [0], [0], [1], [0, 0, 1, 1], [], []>} : vector<64x16xbf16>, vector<16x32xbf16>, vector<64x32xf32> -> vector<64x32xf32>
    %c0_44 = arith.constant 0 : index
    %c0_45 = arith.constant 0 : index
    %87 = vector.load %arg11[%c0_44, %c0_45] : memref<1x32xf32, #tpu.memory_space<vmem>>, vector<1x32xf32>
    %88 = vector.broadcast %87 : vector<1x32xf32> to vector<64x32xf32>
    %89 = arith.addf %86, %88 : vector<64x32xf32>
    %90 = arith.addf %89, %8 : vector<64x32xf32>
    %cst_46 = arith.constant 0.000000e+00 : f32
    %91 = vector.broadcast %cst_46 : f32 to vector<64x32xf32>
    %92 = arith.maximumf %90, %91 : vector<64x32xf32>
    %c0_47 = arith.constant 0 : index
    %c0_48 = arith.constant 0 : index
    %c0_49 = arith.constant 0 : index
    %c0_50 = arith.constant 0 : index
    %93 = vector.load %arg13[%c0_47, %c0_48, %c0_49, %c0_50] : memref<1x1x64x32xf32, #tpu.memory_space<vmem>>, vector<1x1x64x32xf32>
    %94 = vector.shape_cast %93 : vector<1x1x64x32xf32> to vector<64x32xf32>
    %95 = vector.shape_cast %92 : vector<64x32xf32> to vector<1x1x64x32xf32>
    tpu.vector_store %arg13[%c0_47, %c0_48, %c0_49, %c0_50], %95 {strides = array<i32>} : memref<1x1x64x32xf32, #tpu.memory_space<vmem>>, vector<1x1x64x32xf32>,
    return
  }
  func.func @transform_0(%arg0: i32, %arg1: i32) -> (i32, i32, i32, i32) {
    %c0_i32 = arith.constant 0 : i32
    %c0_i32_0 = arith.constant 0 : i32
    %c0_i32_1 = arith.constant 0 : i32
    return %arg0, %arg1, %c0_i32, %c0_i32_0 : i32, i32, i32, i32
  }
  func.func @transform_1(%arg0: i32, %arg1: i32) -> (i32, i32) {
    %c0_i32 = arith.constant 0 : i32
    %c0_i32_0 = arith.constant 0 : i32
    %c0_i32_1 = arith.constant 0 : i32
    return %c0_i32, %c0_i32_0 : i32, i32
  }
  func.func @transform_2(%arg0: i32, %arg1: i32) -> (i32, i32) {
    %c0_i32 = arith.constant 0 : i32
    %c0_i32_0 = arith.constant 0 : i32
    %c0_i32_1 = arith.constant 0 : i32
    return %c0_i32, %c0_i32_0 : i32, i32
  }
  func.func @transform_3(%arg0: i32, %arg1: i32) -> (i32, i32) {
    %c0_i32 = arith.constant 0 : i32
    %c0_i32_0 = arith.constant 0 : i32
    %c0_i32_1 = arith.constant 0 : i32
    return %c0_i32, %c0_i32_0 : i32, i32
  }
  func.func @transform_4(%arg0: i32, %arg1: i32) -> (i32, i32) {
    %c0_i32 = arith.constant 0 : i32
    %c0_i32_0 = arith.constant 0 : i32
    %c0_i32_1 = arith.constant 0 : i32
    return %c0_i32, %c0_i32_0 : i32, i32
  }
  func.func @transform_5(%arg0: i32, %arg1: i32) -> (i32, i32) {
    %c0_i32 = arith.constant 0 : i32
    %c0_i32_0 = arith.constant 0 : i32
    %c0_i32_1 = arith.constant 0 : i32
    return %c0_i32, %c0_i32_0 : i32, i32
  }
  func.func @transform_6(%arg0: i32, %arg1: i32) -> (i32, i32) {
    %c0_i32 = arith.constant 0 : i32
    %c0_i32_0 = arith.constant 0 : i32
    %c0_i32_1 = arith.constant 0 : i32
    return %c0_i32, %c0_i32_0 : i32, i32
  }
  func.func @transform_7(%arg0: i32, %arg1: i32) -> (i32, i32) {
    %c0_i32 = arith.constant 0 : i32
    %c0_i32_0 = arith.constant 0 : i32
    %c0_i32_1 = arith.constant 0 : i32
    return %c0_i32, %c0_i32_0 : i32, i32
  }
  func.func @transform_8(%arg0: i32, %arg1: i32) -> (i32, i32) {
    %c0_i32 = arith.constant 0 : i32
    %c0_i32_0 = arith.constant 0 : i32
    %c0_i32_1 = arith.constant 0 : i32
    return %c0_i32, %c0_i32_0 : i32, i32
  }
  func.func @transform_9(%arg0: i32, %arg1: i32) -> (i32, i32) {
    %c0_i32 = arith.constant 0 : i32
    %c0_i32_0 = arith.constant 0 : i32
    %c0_i32_1 = arith.constant 0 : i32
    return %c0_i32, %c0_i32_0 : i32, i32
  }
  func.func @transform_10(%arg0: i32, %arg1: i32) -> (i32, i32) {
    %c0_i32 = arith.constant 0 : i32
    %c0_i32_0 = arith.constant 0 : i32
    %c0_i32_1 = arith.constant 0 : i32
    return %c0_i32, %c0_i32_0 : i32, i32
  }
  func.func @transform_11(%arg0: i32, %arg1: i32) -> (i32, i32, i32, i32) {
    %c0_i32 = arith.constant 0 : i32
    %c0_i32_0 = arith.constant 0 : i32
    %c0_i32_1 = arith.constant 0 : i32
    return %arg0, %arg1, %c0_i32, %c0_i32_0 : i32, i32, i32, i32
  }
}

</mosaic_0001>

<llo_original>
// kernel: tpu_custom_call.1
$region0: #{tpu_custom_call.1}
  #allocation0 [shape = 'u32[]', space=smem, size = 0x4, offset = 0x4, fixed_abs, tag = 'smem constant byte address 0x4 - core index']
  #allocation1 [shape = 'u32[72,128]{1,0:T(1,128)}', space=vmem, size = 0x9000, scoped, tag = 'internal scratch']
  %s0 = inlined_call_operand.vmem [shape: bf16[2,2,192,4], index: 0, kind: input, shape index: {}]
  %s1 = inlined_call_operand.vmem [shape: f32[16,16], index: 1, kind: input, shape index: {}]
  %s2 = inlined_call_operand.vmem [shape: bf16[4,64], index: 2, kind: input, shape index: {}]
  %s3 = inlined_call_operand.vmem [shape: f32[1,32], index: 3, kind: input, shape index: {}]
  %s4 = inlined_call_operand.vmem [shape: bf16[32,16], index: 4, kind: input, shape index: {}]
  %s5 = inlined_call_operand.vmem [shape: f32[1,16], index: 5, kind: input, shape index: {}]
  %s6 = inlined_call_operand.vmem [shape: bf16[144,16], index: 6, kind: input, shape index: {}]
  %s7 = inlined_call_operand.vmem [shape: f32[1,16], index: 7, kind: input, shape index: {}]
  %s8 = inlined_call_operand.vmem [shape: bf16[16,32], index: 8, kind: input, shape index: {}]
  %s9 = inlined_call_operand.vmem [shape: f32[1,32], index: 9, kind: input, shape index: {}]
  %s10 = inlined_call_operand.vmem [shape: f32[1,32], index: 10, kind: input, shape index: {}]
  %s11 = inlined_call_operand.vmem [shape: f32[2,2,64,32], index: 11, kind: output, shape index: {}]
  %s12 = sld [smem:[#allocation0]]
  $region77: #{tpu_custom_call.1} parent=0
    _
  %s14 = ssub.s32 1, %s12
  %s15 = scalar_select 0, %s14, %s12
  loop: start=0, step=1, limit=6
  $region2: #{tpu_custom_call.1} parent=0 // loop_pre_header
    _
  $region3: #{tpu_custom_call.1} parent=0 // loop_header
    %s17 = sphi 0, %s21
    %p18 = scmp.ge.s32.totalorder %s17, 6
    %s24 = sphi 0, %s36
    %s25 = sphi 0, %s32
    %s26 = sphi 0, %s24
    %s27 = sphi 0, %s25
    %s28 = sphi 0, %s26
    %s29 = sphi 0, %s27
    %s41 = sphi 0, %s43
    %s44 = sphi 0, %s41
    %s45 = sphi 0, %s44
    %s61 = sphi 0, %s45
    %s65 = sphi 0, %s65
    %s67 = sphi 0, %s65
    %s68 = sphi 0, %s67
    %s82 = sphi 0, %s68
    %s86 = sphi 0, %s86
    %s88 = sphi 0, %s86
    %s89 = sphi 0, %s88
    %s103 = sphi 0, %s89
    %s107 = sphi 0, %s107
    %s109 = sphi 0, %s107
    %s110 = sphi 0, %s109
    %s124 = sphi 0, %s110
    %s128 = sphi 0, %s128
    %s130 = sphi 0, %s128
    %s131 = sphi 0, %s130
    %s145 = sphi 0, %s131
    %s149 = sphi 0, %s149
    %s151 = sphi 0, %s149
    %s152 = sphi 0, %s151
    %s166 = sphi 0, %s152
    %s170 = sphi 0, %s170
    %s172 = sphi 0, %s170
    %s173 = sphi 0, %s172
    %s187 = sphi 0, %s173
    %s191 = sphi 0, %s191
    %s193 = sphi 0, %s191
    %s194 = sphi 0, %s193
    %s208 = sphi 0, %s194
    %s212 = sphi 0, %s212
    %s214 = sphi 0, %s212
    %s215 = sphi 0, %s214
    %s229 = sphi 0, %s215
    %s233 = sphi 0, %s233
    %s235 = sphi 0, %s233
    %s236 = sphi 0, %s235
    %s250 = sphi 0, %s236
    %s254 = sphi 0, %s254
    %s256 = sphi 0, %s254
    %s257 = sphi 0, %s256
    %s271 = sphi 0, %s257
    %s279 = sphi 0, %s281
    %s282 = sphi 0, %s279
    %s283 = sphi 0, %s282
    %s299 = sphi 0, %s283
  $region4: #{tpu_custom_call.1} parent=0 // loop_header_branch
    %20 = sbr.rel (%p18) target = $region8
  $region5: #{tpu_custom_call.1} parent=0 // loop_body
    %s22 = ssub.s32 %s17, 1
    %s23 = ssub.s32 %s17, 2
    %s30 = sadd.s32 1, %s25
    %p31 = scmp.ge.s32.totalorder %s30, 2
    %s32 = scalar_select %p31, 0, %s30
    %s33 = sadd.s32 1, %s24
    %s34 = scalar_select %p31, %s33, %s24
    %p35 = scmp.ge.s32.totalorder %s34, 2
    %s36 = scalar_select %p35, 0, %s34
    %s37 = ssub.s32 %s24, %s36
    %s38 = ssub.s32 %s25, %s32
    %s39 = sor.u32 %s37, %s38
    %p40 = scmp.eq.s32.totalorder %s39, 0
    %s42 = sadd.s32 %s41, 1
    %s43 = scalar_select %p40, %s41, %s42
    %p46 = pneg %p40
    %p47 = scmp.eq.s32.totalorder %s17, 3
    %p48 = por %p46, %p47
    %p49 = scmp.ne.s32.totalorder %s41, %s44
    %p50 = scmp.eq.s32.totalorder %s17, 0
    %p51 = por %p49, %p50
    %p52 = scmp.ne.s32.totalorder %s41, %s44
    %p53 = scmp.eq.s32.totalorder %s22, 3
    %p54 = por %p52, %p53
    %p55 = scmp.ne.s32.totalorder %s44, %s45
    %p56 = scmp.eq.s32.totalorder %s22, 0
    %p57 = por %p55, %p56
    %p58 = scmp.ne.s32.totalorder %s44, %s45
    %p59 = scmp.eq.s32.totalorder %s23, 3
    %p60 = por %p58, %p59
    %p62 = scmp.ne.s32.totalorder %s45, %s61
    %p63 = scmp.eq.s32.totalorder %s23, 0
    %p64 = por %p62, %p63
    %s66 = sadd.s32 %s65, 1
    %p69 = scmp.eq.s32.totalorder %s17, 3
    %p70 = scmp.ne.s32.totalorder %s65, %s67
    %p71 = scmp.eq.s32.totalorder %s17, 0
    %p72 = por %p70, %p71
    %p73 = scmp.ne.s32.totalorder %s65, %s67
    %p74 = scmp.eq.s32.totalorder %s22, 3
    %p75 = por %p73, %p74
    %p76 = scmp.ne.s32.totalorder %s67, %s68
    %p77 = scmp.eq.s32.totalorder %s22, 0
    %p78 = por %p76, %p77
    %p79 = scmp.ne.s32.totalorder %s67, %s68
    %p80 = scmp.eq.s32.totalorder %s23, 3
    %p81 = por %p79, %p80
    %p83 = scmp.ne.s32.totalorder %s68, %s82
    %p84 = scmp.eq.s32.totalorder %s23, 0
    %p85 = por %p83, %p84
    %s87 = sadd.s32 %s86, 1
    %p90 = scmp.eq.s32.totalorder %s17, 3
    %p91 = scmp.ne.s32.totalorder %s86, %s88
    %p92 = scmp.eq.s32.totalorder %s17, 0
    %p93 = por %p91, %p92
    %p94 = scmp.ne.s32.totalorder %s86, %s88
    %p95 = scmp.eq.s32.totalorder %s22, 3
    %p96 = por %p94, %p95
    %p97 = scmp.ne.s32.totalorder %s88, %s89
    %p98 = scmp.eq.s32.totalorder %s22, 0
    %p99 = por %p97, %p98
    %p100 = scmp.ne.s32.totalorder %s88, %s89
    %p101 = scmp.eq.s32.totalorder %s23, 3
    %p102 = por %p100, %p101
    %p104 = scmp.ne.s32.totalorder %s89, %s103
    %p105 = scmp.eq.s32.totalorder %s23, 0
    %p106 = por %p104, %p105
    %s108 = sadd.s32 %s107, 1
    %p111 = scmp.eq.s32.totalorder %s17, 3
    %p112 = scmp.ne.s32.totalorder %s107, %s109
    %p113 = scmp.eq.s32.totalorder %s17, 0
    %p114 = por %p112, %p113
    %p115 = scmp.ne.s32.totalorder %s107, %s109
    %p116 = scmp.eq.s32.totalorder %s22, 3
    %p117 = por %p115, %p116
    %p118 = scmp.ne.s32.totalorder %s109, %s110
    %p119 = scmp.eq.s32.totalorder %s22, 0
    %p120 = por %p118, %p119
    %p121 = scmp.ne.s32.totalorder %s109, %s110
    %p122 = scmp.eq.s32.totalorder %s23, 3
    %p123 = por %p121, %p122
    %p125 = scmp.ne.s32.totalorder %s110, %s124
    %p126 = scmp.eq.s32.totalorder %s23, 0
    %p127 = por %p125, %p126
    %s129 = sadd.s32 %s128, 1
    %p132 = scmp.eq.s32.totalorder %s17, 3
    %p133 = scmp.ne.s32.totalorder %s128, %s130
    %p134 = scmp.eq.s32.totalorder %s17, 0
    %p135 = por %p133, %p134
    %p136 = scmp.ne.s32.totalorder %s128, %s130
    %p137 = scmp.eq.s32.totalorder %s22, 3
    %p138 = por %p136, %p137
    %p139 = scmp.ne.s32.totalorder %s130, %s131
    %p140 = scmp.eq.s32.totalorder %s22, 0
    %p141 = por %p139, %p140
    %p142 = scmp.ne.s32.totalorder %s130, %s131
    %p143 = scmp.eq.s32.totalorder %s23, 3
    %p144 = por %p142, %p143
    %p146 = scmp.ne.s32.totalorder %s131, %s145
    %p147 = scmp.eq.s32.totalorder %s23, 0
    %p148 = por %p146, %p147
    %s150 = sadd.s32 %s149, 1
    %p153 = scmp.eq.s32.totalorder %s17, 3
    %p154 = scmp.ne.s32.totalorder %s149, %s151
    %p155 = scmp.eq.s32.totalorder %s17, 0
    %p156 = por %p154, %p155
    %p157 = scmp.ne.s32.totalorder %s149, %s151
    %p158 = scmp.eq.s32.totalorder %s22, 3
    %p159 = por %p157, %p158
    %p160 = scmp.ne.s32.totalorder %s151, %s152
    %p161 = scmp.eq.s32.totalorder %s22, 0
    %p162 = por %p160, %p161
    %p163 = scmp.ne.s32.totalorder %s151, %s152
    %p164 = scmp.eq.s32.totalorder %s23, 3
    %p165 = por %p163, %p164
    %p167 = scmp.ne.s32.totalorder %s152, %s166
    %p168 = scmp.eq.s32.totalorder %s23, 0
    %p169 = por %p167, %p168
    %s171 = sadd.s32 %s170, 1
    %p174 = scmp.eq.s32.totalorder %s17, 3
    %p175 = scmp.ne.s32.totalorder %s170, %s172
    %p176 = scmp.eq.s32.totalorder %s17, 0
    %p177 = por %p175, %p176
    %p178 = scmp.ne.s32.totalorder %s170, %s172
    %p179 = scmp.eq.s32.totalorder %s22, 3
    %p180 = por %p178, %p179
    %p181 = scmp.ne.s32.totalorder %s172, %s173
    %p182 = scmp.eq.s32.totalorder %s22, 0
    %p183 = por %p181, %p182
    %p184 = scmp.ne.s32.totalorder %s172, %s173
    %p185 = scmp.eq.s32.totalorder %s23, 3
    %p186 = por %p184, %p185
    %p188 = scmp.ne.s32.totalorder %s173, %s187
    %p189 = scmp.eq.s32.totalorder %s23, 0
    %p190 = por %p188, %p189
    %s192 = sadd.s32 %s191, 1
    %p195 = scmp.eq.s32.totalorder %s17, 3
    %p196 = scmp.ne.s32.totalorder %s191, %s193
    %p197 = scmp.eq.s32.totalorder %s17, 0
    %p198 = por %p196, %p197
    %p199 = scmp.ne.s32.totalorder %s191, %s193
    %p200 = scmp.eq.s32.totalorder %s22, 3
    %p201 = por %p199, %p200
    %p202 = scmp.ne.s32.totalorder %s193, %s194
    %p203 = scmp.eq.s32.totalorder %s22, 0
    %p204 = por %p202, %p203
    %p205 = scmp.ne.s32.totalorder %s193, %s194
    %p206 = scmp.eq.s32.totalorder %s23, 3
    %p207 = por %p205, %p206
    %p209 = scmp.ne.s32.totalorder %s194, %s208
    %p210 = scmp.eq.s32.totalorder %s23, 0
    %p211 = por %p209, %p210
    %s213 = sadd.s32 %s212, 1
    %p216 = scmp.eq.s32.totalorder %s17, 3
    %p217 = scmp.ne.s32.totalorder %s212, %s214
    %p218 = scmp.eq.s32.totalorder %s17, 0
    %p219 = por %p217, %p218
    %p220 = scmp.ne.s32.totalorder %s212, %s214
    %p221 = scmp.eq.s32.totalorder %s22, 3
    %p222 = por %p220, %p221
    %p223 = scmp.ne.s32.totalorder %s214, %s215
    %p224 = scmp.eq.s32.totalorder %s22, 0
    %p225 = por %p223, %p224
    %p226 = scmp.ne.s32.totalorder %s214, %s215
    %p227 = scmp.eq.s32.totalorder %s23, 3
    %p228 = por %p226, %p227
    %p230 = scmp.ne.s32.totalorder %s215, %s229
    %p231 = scmp.eq.s32.totalorder %s23, 0
    %p232 = por %p230, %p231
    %s234 = sadd.s32 %s233, 1
    %p237 = scmp.eq.s32.totalorder %s17, 3
    %p238 = scmp.ne.s32.totalorder %s233, %s235
    %p239 = scmp.eq.s32.totalorder %s17, 0
    %p240 = por %p238, %p239
    %p241 = scmp.ne.s32.totalorder %s233, %s235
    %p242 = scmp.eq.s32.totalorder %s22, 3
    %p243 = por %p241, %p242
    %p244 = scmp.ne.s32.totalorder %s235, %s236
    %p245 = scmp.eq.s32.totalorder %s22, 0
    %p246 = por %p244, %p245
    %p247 = scmp.ne.s32.totalorder %s235, %s236
    %p248 = scmp.eq.s32.totalorder %s23, 3
    %p249 = por %p247, %p248
    %p251 = scmp.ne.s32.totalorder %s236, %s250
    %p252 = scmp.eq.s32.totalorder %s23, 0
    %p253 = por %p251, %p252
    %s255 = sadd.s32 %s254, 1
    %p258 = scmp.eq.s32.totalorder %s17, 3
    %p259 = scmp.ne.s32.totalorder %s254, %s256
    %p260 = scmp.eq.s32.totalorder %s17, 0
    %p261 = por %p259, %p260
    %p262 = scmp.ne.s32.totalorder %s254, %s256
    %p263 = scmp.eq.s32.totalorder %s22, 3
    %p264 = por %p262, %p263
    %p265 = scmp.ne.s32.totalorder %s256, %s257
    %p266 = scmp.eq.s32.totalorder %s22, 0
    %p267 = por %p265, %p266
    %p268 = scmp.ne.s32.totalorder %s256, %s257
    %p269 = scmp.eq.s32.totalorder %s23, 3
    %p270 = por %p268, %p269
    %p272 = scmp.ne.s32.totalorder %s257, %s271
    %p273 = scmp.eq.s32.totalorder %s23, 0
    %p274 = por %p272, %p273
    %s275 = ssub.s32 %s24, %s36
    %s276 = ssub.s32 %s25, %s32
    %s277 = sor.u32 %s275, %s276
    %p278 = scmp.eq.s32.totalorder %s277, 0
    %s280 = sadd.s32 %s279, 1
    %s281 = scalar_select %p278, %s279, %s280
    %p284 = pneg %p278
    %p285 = scmp.eq.s32.totalorder %s17, 3
    %p286 = por %p284, %p285
    %p287 = scmp.ne.s32.totalorder %s279, %s282
    %p288 = scmp.eq.s32.totalorder %s17, 0
    %p289 = por %p287, %p288
    %p290 = scmp.ne.s32.totalorder %s279, %s282
    %p291 = scmp.eq.s32.totalorder %s22, 3
    %p292 = por %p290, %p291
    %p293 = scmp.ne.s32.totalorder %s282, %s283
    %p294 = scmp.eq.s32.totalorder %s22, 0
    %p295 = por %p293, %p294
    %p296 = scmp.ne.s32.totalorder %s282, %s283
    %p297 = scmp.eq.s32.totalorder %s23, 3
    %p298 = por %p296, %p297
    %p300 = scmp.ne.s32.totalorder %s283, %s299
    %p301 = scmp.eq.s32.totalorder %s23, 0
    %p302 = por %p300, %p301
    %p303 = scmp.le.s32.totalorder 1, %s17
    %p304 = scmp.lt.s32.totalorder %s17, 5
    %p305 = pnand %p303, %p304
    %p306 = pneg %p305
    // Predicated region
    $region9: #{tpu_custom_call.1} parent=5 // pred_check
      _
    $region10: #{tpu_custom_call.1} parent=5 // pred_check_branch
      %308 = sbr.rel (%p305) target = $region12
    $region11: #{tpu_custom_call.1} parent=5 // pred_region
      %s309 = ssub.s32 %s17, 1
      // Predicated region
      $region13: #{tpu_custom_call.1} parent=11 // pred_check
        %p310 = pneg %p78
      $region14: #{tpu_custom_call.1} parent=11 // pred_check_branch
        %312 = sbr.rel (%p310) target = $region16
      $region15: #{tpu_custom_call.1} parent=11 // pred_region
        _
      $region16: #{tpu_custom_call.1} parent=11 // pred_fallthru
        _
      // Predicated region
      $region17: #{tpu_custom_call.1} parent=11 // pred_check
        %p313 = pneg %p99
      $region18: #{tpu_custom_call.1} parent=11 // pred_check_branch
        %315 = sbr.rel (%p313) target = $region20
      $region19: #{tpu_custom_call.1} parent=11 // pred_region
        _
      $region20: #{tpu_custom_call.1} parent=11 // pred_fallthru
        _
      // Predicated region
      $region21: #{tpu_custom_call.1} parent=11 // pred_check
        %p316 = pneg %p120
      $region22: #{tpu_custom_call.1} parent=11 // pred_check_branch
        %318 = sbr.rel (%p316) target = $region24
      $region23: #{tpu_custom_call.1} parent=11 // pred_region
        _
      $region24: #{tpu_custom_call.1} parent=11 // pred_fallthru
        _
      // Predicated region
      $region25: #{tpu_custom_call.1} parent=11 // pred_check
        %p319 = pneg %p141
      $region26: #{tpu_custom_call.1} parent=11 // pred_check_branch
        %321 = sbr.rel (%p319) target = $region28
      $region27: #{tpu_custom_call.1} parent=11 // pred_region
        _
      $region28: #{tpu_custom_call.1} parent=11 // pred_fallthru
        _
      // Predicated region
      $region29: #{tpu_custom_call.1} parent=11 // pred_check
        %p322 = pneg %p162
      $region30: #{tpu_custom_call.1} parent=11 // pred_check_branch
        %324 = sbr.rel (%p322) target = $region32
      $region31: #{tpu_custom_call.1} parent=11 // pred_region
        _
      $region32: #{tpu_custom_call.1} parent=11 // pred_fallthru
        _
      // Predicated region
      $region33: #{tpu_custom_call.1} parent=11 // pred_check
        %p325 = pneg %p183
      $region34: #{tpu_custom_call.1} parent=11 // pred_check_branch
        %327 = sbr.rel (%p325) target = $region36
      $region35: #{tpu_custom_call.1} parent=11 // pred_region
        _
      $region36: #{tpu_custom_call.1} parent=11 // pred_fallthru
        _
      // Predicated region
      $region37: #{tpu_custom_call.1} parent=11 // pred_check
        %p328 = pneg %p204
      $region38: #{tpu_custom_call.1} parent=11 // pred_check_branch
        %330 = sbr.rel (%p328) target = $region40
      $region39: #{tpu_custom_call.1} parent=11 // pred_region
        _
      $region40: #{tpu_custom_call.1} parent=11 // pred_fallthru
        _
      // Predicated region
      $region41: #{tpu_custom_call.1} parent=11 // pred_check
        %p331 = pneg %p225
      $region42: #{tpu_custom_call.1} parent=11 // pred_check_branch
        %333 = sbr.rel (%p331) target = $region44
      $region43: #{tpu_custom_call.1} parent=11 // pred_region
        _
      $region44: #{tpu_custom_call.1} parent=11 // pred_fallthru
        _
      // Predicated region
      $region45: #{tpu_custom_call.1} parent=11 // pred_check
        %p334 = pneg %p246
      $region46: #{tpu_custom_call.1} parent=11 // pred_check_branch
        %336 = sbr.rel (%p334) target = $region48
      $region47: #{tpu_custom_call.1} parent=11 // pred_region
        _
      $region48: #{tpu_custom_call.1} parent=11 // pred_fallthru
        _
      // Predicated region
      $region49: #{tpu_custom_call.1} parent=11 // pred_check
        %p337 = pneg %p267
      $region50: #{tpu_custom_call.1} parent=11 // pred_check_branch
        %339 = sbr.rel (%p337) target = $region52
      $region51: #{tpu_custom_call.1} parent=11 // pred_region
        _
      $region52: #{tpu_custom_call.1} parent=11 // pred_fallthru
        _
    $region12: #{tpu_custom_call.1} parent=5 // pred_fallthru
      _
    %p340 = scmp.lt.s32.totalorder %s17, 4
    // Predicated region
    $region53: #{tpu_custom_call.1} parent=5 // pred_check
      %p341 = pneg %p340
    $region54: #{tpu_custom_call.1} parent=5 // pred_check_branch
      %343 = sbr.rel (%p341) target = $region56
    $region55: #{tpu_custom_call.1} parent=5 // pred_region
      // Predicated region
      $region57: #{tpu_custom_call.1} parent=55 // pred_check
        %p344 = pneg %p51
      $region58: #{tpu_custom_call.1} parent=55 // pred_check_branch
        %346 = sbr.rel (%p344) target = $region60
      $region59: #{tpu_custom_call.1} parent=55 // pred_region
        %p347 = scmp.lt.s32.totalorder %s24, 1
        %s348 = scalar_select %p347, %s24, 1
        %p349 = scmp.lt.s32.totalorder %s25, 1
        %s350 = scalar_select %p349, %s25, 1
        %s351 = smul.addr %s350, 24
        %s352 = smul.addr %s348, 48
        %s353 = sadd.s32 %s351, %s352
        %s354 = smul.addr %s353, 4
        %s355 = scalar_lea.vmem %s0, %s354
      $region60: #{tpu_custom_call.1} parent=55 // pred_fallthru
        _
    $region56: #{tpu_custom_call.1} parent=5 // pred_fallthru
      _
    %p356 = scmp.le.s32.totalorder 1, %s17
    %p357 = scmp.lt.s32.totalorder %s17, 5
    %p358 = pnand %p356, %p357
    %p359 = pneg %p358
    // Predicated region
    $region61: #{tpu_custom_call.1} parent=5 // pred_check
      _
    $region62: #{tpu_custom_call.1} parent=5 // pred_check_branch
      %361 = sbr.rel (%p358) target = $region64
    $region63: #{tpu_custom_call.1} parent=5 // pred_region
      %s362 = ssub.s32 %s17, 1
      %p363 = scmp.lt.s32.totalorder %s26, 1
      %s364 = scalar_select %p363, %s26, 1
      %p365 = scmp.lt.s32.totalorder %s27, 1
      %s366 = scalar_select %p365, %s27, 1
      %s367 = smul.addr %s366, 24
      %s368 = smul.addr %s364, 48
      %s369 = sadd.s32 %s367, %s368
      %s370 = smul.addr %s369, 4
      %s371 = scalar_lea.vmem %s0, %s370
      %p372 = pneg %p57
      %p373 = pneg %p54
      %p374 = pneg %p78
      %p375 = pneg %p75
      %p376 = pneg %p99
      %p377 = pneg %p96
      %p378 = pneg %p120
      %p379 = pneg %p117
      %p380 = pneg %p141
      %p381 = pneg %p138
      %p382 = pneg %p162
      %p383 = pneg %p159
      %p384 = pneg %p183
      %p385 = pneg %p180
      %p386 = pneg %p204
      %p387 = pneg %p201
      %p388 = pneg %p225
      %p389 = pneg %p222
      %p390 = pneg %p246
      %p391 = pneg %p243
      %p392 = pneg %p267
      %p393 = pneg %p264
      %p394 = pneg %p295
      %p395 = pneg %p292
      %p396 = scmp.lt.s32.totalorder %s26, 1
      %s397 = scalar_select %p396, %s26, 1
      %p398 = scmp.lt.s32.totalorder %s27, 1
      %s399 = scalar_select %p398, %s27, 1
      %s400 = smul.addr %s399, 8
      %s401 = smul.addr %s397, 16
      %s402 = sadd.s32 %s400, %s401
      %s403 = smul.addr %s402, 8
      %s404 = scalar_lea.vmem %s11, %s403
      %p405 = scmp.lt.s32.totalorder %s26, 1
      %s406 = scalar_select %p405, %s26, 1
      %p407 = scmp.lt.s32.totalorder %s27, 1
      %s408 = scalar_select %p407, %s27, 1
      %s409 = smul.addr %s408, 24
      %s410 = smul.addr %s406, 48
      %s411 = sadd.s32 %s409, %s410
      %s412 = smul.addr %s411, 4
      %s413 = scalar_lea.vmem %s0, %s412
      %p414 = scmp.lt.s32.totalorder %s26, 1
      %s415 = scalar_select %p414, %s26, 1
      %p416 = scmp.lt.s32.totalorder %s27, 1
      %s417 = scalar_select %p416, %s27, 1
      %s418 = smul.addr %s417, 8
      %s419 = smul.addr %s415, 16
      %s420 = sadd.s32 %s418, %s419
      %s421 = smul.addr %s420, 8
      %s422 = scalar_lea.vmem %s11, %s421
      %v424 = vld [vmem:[%s413] sm:$0xf]
      %v425 = vld [vmem:[%s413 + $0x4] sm:$0xf]
      %v426 = vld [vmem:[%s413 + $0x8] sm:$0xf]
      %v427 = vld [vmem:[%s413 + $0xc] sm:$0xf]
      %v428 = vld [vmem:[%s413 + $0x10] sm:$0xf]
      %v429 = vld [vmem:[%s413 + $0x14] sm:$0xf]
      %v430 = vld [vmem:[%s413 + $0x18] sm:$0xf]
      %v431 = vld [vmem:[%s413 + $0x1c] sm:$0xf]
      %v432 = vld [vmem:[%s413 + $0x20] sm:$0xf]
      %v433 = vld [vmem:[%s413 + $0x24] sm:$0xf]
      %v434 = vld [vmem:[%s413 + $0x28] sm:$0xf]
      %v435 = vld [vmem:[%s413 + $0x2c] sm:$0xf]
      %v436 = vld [vmem:[%s413 + $0x30] sm:$0xf]
      %v437 = vld [vmem:[%s413 + $0x34] sm:$0xf]
      %v438 = vld [vmem:[%s413 + $0x38] sm:$0xf]
      %v439 = vld [vmem:[%s413 + $0x3c] sm:$0xf]
      %v440 = vld [vmem:[%s413 + $0x40] sm:$0xf]
      %v441 = vld [vmem:[%s413 + $0x44] sm:$0xf]
      %v442 = vld [vmem:[%s413 + $0x48] sm:$0xf]
      %v443 = vld [vmem:[%s413 + $0x4c] sm:$0xf]
      %v444 = vld [vmem:[%s413 + $0x50] sm:$0xf]
      %v445 = vld [vmem:[%s413 + $0x54] sm:$0xf]
      %v446 = vld [vmem:[%s413 + $0x58] sm:$0xf]
      %v447 = vld [vmem:[%s413 + $0x5c] sm:$0xf]
      %v448 = vld [vmem:[%s2] sm:$0x3]
      %v473 = vunpack.c.l.b16 %v424
      %v474 = vunpack.c.l.b16 %v425
      %v475 = vunpack.c.l.b16 %v426
      %v476 = vunpack.c.l.b16 %v427
      %v477 = vunpack.c.l.b16 %v428
      %v478 = vunpack.c.l.b16 %v429
      %v479 = vunpack.c.l.b16 %v430
      %v480 = vunpack.c.l.b16 %v431
      %v481 = vunpack.c.l.b16 %v432
      %v482 = vunpack.c.l.b16 %v433
      %v483 = vunpack.c.l.b16 %v434
      %v484 = vunpack.c.l.b16 %v435
      %v485 = vunpack.c.l.b16 %v436
      %v486 = vunpack.c.l.b16 %v437
      %v487 = vunpack.c.l.b16 %v438
      %v488 = vunpack.c.l.b16 %v439
      %v489 = vunpack.c.l.b16 %v440
      %v490 = vunpack.c.l.b16 %v441
      %v491 = vunpack.c.l.b16 %v442
      %v492 = vunpack.c.l.b16 %v443
      %v493 = vunpack.c.l.b16 %v444
      %v494 = vunpack.c.l.b16 %v445
      %v495 = vunpack.c.l.b16 %v446
      %v496 = vunpack.c.l.b16 %v447
      %v497 = vpack.c.b16 %v474, %v473
      %v498 = vpack.c.b16 %v476, %v475
      %v499 = vpack.c.b16 %v478, %v477
      %v500 = vpack.c.b16 %v480, %v479
      %v501 = vpack.c.b16 %v482, %v481
      %v502 = vpack.c.b16 %v484, %v483
      %v503 = vpack.c.b16 %v486, %v485
      %v504 = vpack.c.b16 %v488, %v487
      %v505 = vpack.c.b16 %v490, %v489
      %v506 = vpack.c.b16 %v492, %v491
      %v507 = vpack.c.b16 %v494, %v493
      %v508 = vpack.c.b16 %v496, %v495
      %vm509 = vcmask 31744
      %v511 = vsel %vm509, %v497, 0
      %v514 = vsel %vm509, %v498, 0
      %v517 = vsel %vm509, %v499, 0
      %v520 = vsel %vm509, %v500, 0
      %v523 = vsel %vm509, %v501, 0
      %v526 = vsel %vm509, %v502, 0
      %v529 = vsel %vm509, %v503, 0
      %v532 = vsel %vm509, %v504, 0
      %v535 = vsel %vm509, %v505, 0
      %v538 = vsel %vm509, %v506, 0
      %v541 = vsel %vm509, %v507, 0
      %v544 = vsel %vm509, %v508, 0
      %vm546 = vcmask 1041408
      %v548 = vsel %vm546, %v448, 0
      %550 = vmatpush.bf16.msra.mxu0 0
      %551 = vmatpush.bf16.msra.mxu0 0
      %552 = vmatpush.bf16.msra.mxu0 0
      %553 = vmatpush.bf16.msra.mxu0 0
      %554 = vmatpush.bf16.msra.mxu0 0
      %555 = vmatpush.bf16.msra.mxu0 0
      %556 = vmatpush.bf16.msra.mxu0 0
      %557 = vmatpush.bf16.msra.mxu0 %v548
      %558 = vmatmul.bf16.gmra.mxu0 %v511
      %v559 = vpop.f32.mrf.mxu0
      %v560 = vadd.f32 0.0, %v559
      %v561 = vpop.f32.mrf.mxu0
      %v562 = vadd.f32 0.0, %v561
      %563 = vmatmul.bf16.gmra.mxu0 %v514
      %v564 = vpop.f32.mrf.mxu0
      %v565 = vadd.f32 0.0, %v564
      %v566 = vpop.f32.mrf.mxu0
      %v567 = vadd.f32 0.0, %v566
      %568 = vmatmul.bf16.gmra.mxu0 %v517
      %v569 = vpop.f32.mrf.mxu0
      %v570 = vadd.f32 0.0, %v569
      %v571 = vpop.f32.mrf.mxu0
      %v572 = vadd.f32 0.0, %v571
      %573 = vmatmul.bf16.gmra.mxu0 %v520
      %v574 = vpop.f32.mrf.mxu0
      %v575 = vadd.f32 0.0, %v574
      %v576 = vpop.f32.mrf.mxu0
      %v577 = vadd.f32 0.0, %v576
      %578 = vmatmul.bf16.gmra.mxu0 %v523
      %v579 = vpop.f32.mrf.mxu0
      %v580 = vadd.f32 0.0, %v579
      %v581 = vpop.f32.mrf.mxu0
      %v582 = vadd.f32 0.0, %v581
      %583 = vmatmul.bf16.gmra.mxu0 %v526
      %v584 = vpop.f32.mrf.mxu0
      %v585 = vadd.f32 0.0, %v584
      %v586 = vpop.f32.mrf.mxu0
      %v587 = vadd.f32 0.0, %v586
      %588 = vmatmul.bf16.gmra.mxu0 %v529
      %v589 = vpop.f32.mrf.mxu0
      %v590 = vadd.f32 0.0, %v589
      %v591 = vpop.f32.mrf.mxu0
      %v592 = vadd.f32 0.0, %v591
      %593 = vmatmul.bf16.gmra.mxu0 %v532
      %v594 = vpop.f32.mrf.mxu0
      %v595 = vadd.f32 0.0, %v594
      %v596 = vpop.f32.mrf.mxu0
      %v597 = vadd.f32 0.0, %v596
      %598 = vmatmul.bf16.gmra.mxu0 %v535
      %v599 = vpop.f32.mrf.mxu0
      %v600 = vadd.f32 0.0, %v599
      %v601 = vpop.f32.mrf.mxu0
      %v602 = vadd.f32 0.0, %v601
      %603 = vmatmul.bf16.gmra.mxu0 %v538
      %v604 = vpop.f32.mrf.mxu0
      %v605 = vadd.f32 0.0, %v604
      %v606 = vpop.f32.mrf.mxu0
      %v607 = vadd.f32 0.0, %v606
      %608 = vmatmul.bf16.gmra.mxu0 %v541
      %v609 = vpop.f32.mrf.mxu0
      %v610 = vadd.f32 0.0, %v609
      %v611 = vpop.f32.mrf.mxu0
      %v612 = vadd.f32 0.0, %v611
      %613 = vmatmul.bf16.gmra.mxu0 %v544
      %v614 = vpop.f32.mrf.mxu0
      %v615 = vadd.f32 0.0, %v614
      %v616 = vpop.f32.mrf.mxu0
      %v617 = vadd.f32 0.0, %v616
      %618 = vdwg.mxu0
      %v619 = vld [vmem:[%s10] sm:$0x1]
      %v621 = vperm.slane %v619, 0
      %622 = vrot.lane.b32.xlu0 %v621, 32
      %v623 = vpop.permute.xlu0 %622
      %v625 = vadd.f32 %v580, %v623
      %v626 = vadd.f32 %v582, %v623
      %v627 = vadd.f32 %v585, %v623
      %v628 = vadd.f32 %v587, %v623
      %v629 = vadd.f32 %v590, %v623
      %v630 = vadd.f32 %v592, %v623
      %v631 = vadd.f32 %v595, %v623
      %v632 = vadd.f32 %v597, %v623
      %v633 = vld [vmem:[%s1] sm:$0xff]
      %v634 = vld [vmem:[%s1 + $0x8] sm:$0xff]
      %vm635 = vcmask 130048
      %v637 = vsel %vm635, %v633, 0
      %v640 = vsel %vm635, %v634, 0
      %642 = vmatpush.msra.mxu0 0.0
      %643 = vmatpush.msra.mxu0 0.0
      %644 = vmatpush.msra.mxu0 0.0
      %645 = vmatpush.msra.mxu0 0.0
      %646 = vmatpush.msra.mxu0 0.0
      %647 = vmatpush.msra.mxu0 0.0
      %648 = vmatpush.msra.mxu0 0.0
      %649 = vmatpush.msra.mxu0 0.0
      %650 = vmatpush.msra.mxu0 0.0
      %651 = vmatpush.msra.mxu0 0.0
      %652 = vmatpush.msra.mxu0 0.0
      %653 = vmatpush.msra.mxu0 0.0
      %654 = vmatpush.msra.mxu0 0.0
      %655 = vmatpush.msra.mxu0 0.0
      %656 = vmatpush.msra.mxu0 %v562
      %657 = vmatpush.msra.mxu0 %v560
      %658 = vmatmul.f32.gmra.mxu0 %v637
      %v659 = vpop.f32.mrf.mxu0
      %v660 = vadd.f32 0.0, %v659
      %661 = vmatmul.f32.gmra.mxu0 %v640
      %v662 = vpop.f32.mrf.mxu0
      %v663 = vadd.f32 0.0, %v662
      %664 = vdwg.mxu0
      %665 = vmatpush.msra.mxu0 0.0
      %666 = vmatpush.msra.mxu0 0.0
      %667 = vmatpush.msra.mxu0 0.0
      %668 = vmatpush.msra.mxu0 0.0
      %669 = vmatpush.msra.mxu0 0.0
      %670 = vmatpush.msra.mxu0 0.0
      %671 = vmatpush.msra.mxu0 0.0
      %672 = vmatpush.msra.mxu0 0.0
      %673 = vmatpush.msra.mxu0 0.0
      %674 = vmatpush.msra.mxu0 0.0
      %675 = vmatpush.msra.mxu0 0.0
      %676 = vmatpush.msra.mxu0 0.0
      %677 = vmatpush.msra.mxu0 0.0
      %678 = vmatpush.msra.mxu0 0.0
      %679 = vmatpush.msra.mxu0 %v567
      %680 = vmatpush.msra.mxu0 %v565
      %681 = vmatmul.f32.gmra.mxu0 %v637
      %v682 = vpop.f32.mrf.mxu0
      %v683 = vadd.f32 0.0, %v682
      %684 = vmatmul.f32.gmra.mxu0 %v640
      %v685 = vpop.f32.mrf.mxu0
      %v686 = vadd.f32 0.0, %v685
      %687 = vdwg.mxu0
      %688 = vmatpush.msra.mxu0 0.0
      %689 = vmatpush.msra.mxu0 0.0
      %690 = vmatpush.msra.mxu0 0.0
      %691 = vmatpush.msra.mxu0 0.0
      %692 = vmatpush.msra.mxu0 0.0
      %693 = vmatpush.msra.mxu0 0.0
      %694 = vmatpush.msra.mxu0 0.0
      %695 = vmatpush.msra.mxu0 0.0
      %696 = vmatpush.msra.mxu0 0.0
      %697 = vmatpush.msra.mxu0 0.0
      %698 = vmatpush.msra.mxu0 0.0
      %699 = vmatpush.msra.mxu0 0.0
      %700 = vmatpush.msra.mxu0 0.0
      %701 = vmatpush.msra.mxu0 0.0
      %702 = vmatpush.msra.mxu0 %v572
      %703 = vmatpush.msra.mxu0 %v570
      %704 = vmatmul.f32.gmra.mxu0 %v637
      %v705 = vpop.f32.mrf.mxu0
      %v706 = vadd.f32 0.0, %v705
      %707 = vmatmul.f32.gmra.mxu0 %v640
      %v708 = vpop.f32.mrf.mxu0
      %v709 = vadd.f32 0.0, %v708
      %710 = vdwg.mxu0
      %711 = vmatpush.msra.mxu0 0.0
      %712 = vmatpush.msra.mxu0 0.0
      %713 = vmatpush.msra.mxu0 0.0
      %714 = vmatpush.msra.mxu0 0.0
      %715 = vmatpush.msra.mxu0 0.0
      %716 = vmatpush.msra.mxu0 0.0
      %717 = vmatpush.msra.mxu0 0.0
      %718 = vmatpush.msra.mxu0 0.0
      %719 = vmatpush.msra.mxu0 0.0
      %720 = vmatpush.msra.mxu0 0.0
      %721 = vmatpush.msra.mxu0 0.0
      %722 = vmatpush.msra.mxu0 0.0
      %723 = vmatpush.msra.mxu0 0.0
      %724 = vmatpush.msra.mxu0 0.0
      %725 = vmatpush.msra.mxu0 %v577
      %726 = vmatpush.msra.mxu0 %v575
      %727 = vmatmul.f32.gmra.mxu0 %v637
      %v728 = vpop.f32.mrf.mxu0
      %v729 = vadd.f32 0.0, %v728
      %730 = vmatmul.f32.gmra.mxu0 %v640
      %v731 = vpop.f32.mrf.mxu0
      %v732 = vadd.f32 0.0, %v731
      %733 = vdwg.mxu0
      %734 = vmatpush.msra.mxu0 0.0
      %735 = vmatpush.msra.mxu0 0.0
      %736 = vmatpush.msra.mxu0 0.0
      %737 = vmatpush.msra.mxu0 0.0
      %738 = vmatpush.msra.mxu0 0.0
      %739 = vmatpush.msra.mxu0 0.0
      %740 = vmatpush.msra.mxu0 0.0
      %741 = vmatpush.msra.mxu0 0.0
      %742 = vmatpush.msra.mxu0 0.0
      %743 = vmatpush.msra.mxu0 0.0
      %744 = vmatpush.msra.mxu0 0.0
      %745 = vmatpush.msra.mxu0 0.0
      %746 = vmatpush.msra.mxu0 0.0
      %747 = vmatpush.msra.mxu0 0.0
      %748 = vmatpush.msra.mxu0 %v582
      %749 = vmatpush.msra.mxu0 %v580
      %750 = vmatmul.f32.gmra.mxu0 %v637
      %v751 = vpop.f32.mrf.mxu0
      %v752 = vadd.f32 0.0, %v751
      %753 = vmatmul.f32.gmra.mxu0 %v640
      %v754 = vpop.f32.mrf.mxu0
      %v755 = vadd.f32 0.0, %v754
      %756 = vdwg.mxu0
      %757 = vmatpush.msra.mxu0 0.0
      %758 = vmatpush.msra.mxu0 0.0
      %759 = vmatpush.msra.mxu0 0.0
      %760 = vmatpush.msra.mxu0 0.0
      %761 = vmatpush.msra.mxu0 0.0
      %762 = vmatpush.msra.mxu0 0.0
      %763 = vmatpush.msra.mxu0 0.0
      %764 = vmatpush.msra.mxu0 0.0
      %765 = vmatpush.msra.mxu0 0.0
      %766 = vmatpush.msra.mxu0 0.0
      %767 = vmatpush.msra.mxu0 0.0
      %768 = vmatpush.msra.mxu0 0.0
      %769 = vmatpush.msra.mxu0 0.0
      %770 = vmatpush.msra.mxu0 0.0
      %771 = vmatpush.msra.mxu0 %v587
      %772 = vmatpush.msra.mxu0 %v585
      %773 = vmatmul.f32.gmra.mxu0 %v637
      %v774 = vpop.f32.mrf.mxu0
      %v775 = vadd.f32 0.0, %v774
      %776 = vmatmul.f32.gmra.mxu0 %v640
      %v777 = vpop.f32.mrf.mxu0
      %v778 = vadd.f32 0.0, %v777
      %779 = vdwg.mxu0
      %780 = vmatpush.msra.mxu0 0.0
      %781 = vmatpush.msra.mxu0 0.0
      %782 = vmatpush.msra.mxu0 0.0
      %783 = vmatpush.msra.mxu0 0.0
      %784 = vmatpush.msra.mxu0 0.0
      %785 = vmatpush.msra.mxu0 0.0
      %786 = vmatpush.msra.mxu0 0.0
      %787 = vmatpush.msra.mxu0 0.0
      %788 = vmatpush.msra.mxu0 0.0
      %789 = vmatpush.msra.mxu0 0.0
      %790 = vmatpush.msra.mxu0 0.0
      %791 = vmatpush.msra.mxu0 0.0
      %792 = vmatpush.msra.mxu0 0.0
      %793 = vmatpush.msra.mxu0 0.0
      %794 = vmatpush.msra.mxu0 %v592
      %795 = vmatpush.msra.mxu0 %v590
      %796 = vmatmul.f32.gmra.mxu0 %v637
      %v797 = vpop.f32.mrf.mxu0
      %v798 = vadd.f32 0.0, %v797
      %799 = vmatmul.f32.gmra.mxu0 %v640
      %v800 = vpop.f32.mrf.mxu0
      %v801 = vadd.f32 0.0, %v800
      %802 = vdwg.mxu0
      %803 = vmatpush.msra.mxu0 0.0
      %804 = vmatpush.msra.mxu0 0.0
      %805 = vmatpush.msra.mxu0 0.0
      %806 = vmatpush.msra.mxu0 0.0
      %807 = vmatpush.msra.mxu0 0.0
      %808 = vmatpush.msra.mxu0 0.0
      %809 = vmatpush.msra.mxu0 0.0
      %810 = vmatpush.msra.mxu0 0.0
      %811 = vmatpush.msra.mxu0 0.0
      %812 = vmatpush.msra.mxu0 0.0
      %813 = vmatpush.msra.mxu0 0.0
      %814 = vmatpush.msra.mxu0 0.0
      %815 = vmatpush.msra.mxu0 0.0
      %816 = vmatpush.msra.mxu0 0.0
      %817 = vmatpush.msra.mxu0 %v597
      %818 = vmatpush.msra.mxu0 %v595
      %819 = vmatmul.f32.gmra.mxu0 %v637
      %v820 = vpop.f32.mrf.mxu0
      %v821 = vadd.f32 0.0, %v820
      %822 = vmatmul.f32.gmra.mxu0 %v640
      %v823 = vpop.f32.mrf.mxu0
      %v824 = vadd.f32 0.0, %v823
      %825 = vdwg.mxu0
      %826 = vmatpush.msra.mxu0 0.0
      %827 = vmatpush.msra.mxu0 0.0
      %828 = vmatpush.msra.mxu0 0.0
      %829 = vmatpush.msra.mxu0 0.0
      %830 = vmatpush.msra.mxu0 0.0
      %831 = vmatpush.msra.mxu0 0.0
      %832 = vmatpush.msra.mxu0 0.0
      %833 = vmatpush.msra.mxu0 0.0
      %834 = vmatpush.msra.mxu0 0.0
      %835 = vmatpush.msra.mxu0 0.0
      %836 = vmatpush.msra.mxu0 0.0
      %837 = vmatpush.msra.mxu0 0.0
      %838 = vmatpush.msra.mxu0 0.0
      %839 = vmatpush.msra.mxu0 0.0
      %840 = vmatpush.msra.mxu0 %v602
      %841 = vmatpush.msra.mxu0 %v600
      %842 = vmatmul.f32.gmra.mxu0 %v637
      %v843 = vpop.f32.mrf.mxu0
      %v844 = vadd.f32 0.0, %v843
      %845 = vmatmul.f32.gmra.mxu0 %v640
      %v846 = vpop.f32.mrf.mxu0
      %v847 = vadd.f32 0.0, %v846
      %848 = vdwg.mxu0
      %849 = vmatpush.msra.mxu0 0.0
      %850 = vmatpush.msra.mxu0 0.0
      %851 = vmatpush.msra.mxu0 0.0
      %852 = vmatpush.msra.mxu0 0.0
      %853 = vmatpush.msra.mxu0 0.0
      %854 = vmatpush.msra.mxu0 0.0
      %855 = vmatpush.msra.mxu0 0.0
      %856 = vmatpush.msra.mxu0 0.0
      %857 = vmatpush.msra.mxu0 0.0
      %858 = vmatpush.msra.mxu0 0.0
      %859 = vmatpush.msra.mxu0 0.0
      %860 = vmatpush.msra.mxu0 0.0
      %861 = vmatpush.msra.mxu0 0.0
      %862 = vmatpush.msra.mxu0 0.0
      %863 = vmatpush.msra.mxu0 %v607
      %864 = vmatpush.msra.mxu0 %v605
      %865 = vmatmul.f32.gmra.mxu0 %v637
      %v866 = vpop.f32.mrf.mxu0
      %v867 = vadd.f32 0.0, %v866
      %868 = vmatmul.f32.gmra.mxu0 %v640
      %v869 = vpop.f32.mrf.mxu0
      %v870 = vadd.f32 0.0, %v869
      %871 = vdwg.mxu0
      %872 = vmatpush.msra.mxu0 0.0
      %873 = vmatpush.msra.mxu0 0.0
      %874 = vmatpush.msra.mxu0 0.0
      %875 = vmatpush.msra.mxu0 0.0
      %876 = vmatpush.msra.mxu0 0.0
      %877 = vmatpush.msra.mxu0 0.0
      %878 = vmatpush.msra.mxu0 0.0
      %879 = vmatpush.msra.mxu0 0.0
      %880 = vmatpush.msra.mxu0 0.0
      %881 = vmatpush.msra.mxu0 0.0
      %882 = vmatpush.msra.mxu0 0.0
      %883 = vmatpush.msra.mxu0 0.0
      %884 = vmatpush.msra.mxu0 0.0
      %885 = vmatpush.msra.mxu0 0.0
      %886 = vmatpush.msra.mxu0 %v612
      %887 = vmatpush.msra.mxu0 %v610
      %888 = vmatmul.f32.gmra.mxu0 %v637
      %v889 = vpop.f32.mrf.mxu0
      %v890 = vadd.f32 0.0, %v889
      %891 = vmatmul.f32.gmra.mxu0 %v640
      %v892 = vpop.f32.mrf.mxu0
      %v893 = vadd.f32 0.0, %v892
      %894 = vdwg.mxu0
      %895 = vmatpush.msra.mxu0 0.0
      %896 = vmatpush.msra.mxu0 0.0
      %897 = vmatpush.msra.mxu0 0.0
      %898 = vmatpush.msra.mxu0 0.0
      %899 = vmatpush.msra.mxu0 0.0
      %900 = vmatpush.msra.mxu0 0.0
      %901 = vmatpush.msra.mxu0 0.0
      %902 = vmatpush.msra.mxu0 0.0
      %903 = vmatpush.msra.mxu0 0.0
      %904 = vmatpush.msra.mxu0 0.0
      %905 = vmatpush.msra.mxu0 0.0
      %906 = vmatpush.msra.mxu0 0.0
      %907 = vmatpush.msra.mxu0 0.0
      %908 = vmatpush.msra.mxu0 0.0
      %909 = vmatpush.msra.mxu0 %v617
      %910 = vmatpush.msra.mxu0 %v615
      %911 = vmatmul.f32.gmra.mxu0 %v637
      %v912 = vpop.f32.mrf.mxu0
      %v913 = vadd.f32 0.0, %v912
      %914 = vmatmul.f32.gmra.mxu0 %v640
      %v915 = vpop.f32.mrf.mxu0
      %v916 = vadd.f32 0.0, %v915
      %917 = vdwg.mxu0
      %v918 = vld [vmem:[%s3] sm:$0x1]
      %v920 = vperm.slane %v918, 0
      %v922 = vadd.f32 %v660, %v920
      %v923 = vadd.f32 %v663, %v920
      %v924 = vadd.f32 %v683, %v920
      %v925 = vadd.f32 %v686, %v920
      %v926 = vadd.f32 %v706, %v920
      %v927 = vadd.f32 %v709, %v920
      %v928 = vadd.f32 %v729, %v920
      %v929 = vadd.f32 %v732, %v920
      %v930 = vadd.f32 %v752, %v920
      %v931 = vadd.f32 %v755, %v920
      %v932 = vadd.f32 %v775, %v920
      %v933 = vadd.f32 %v778, %v920
      %v934 = vadd.f32 %v798, %v920
      %v935 = vadd.f32 %v801, %v920
      %v936 = vadd.f32 %v821, %v920
      %v937 = vadd.f32 %v824, %v920
      %v938 = vadd.f32 %v844, %v920
      %v939 = vadd.f32 %v847, %v920
      %v940 = vadd.f32 %v867, %v920
      %v941 = vadd.f32 %v870, %v920
      %v942 = vadd.f32 %v890, %v920
      %v943 = vadd.f32 %v893, %v920
      %v944 = vadd.f32 %v913, %v920
      %v945 = vadd.f32 %v916, %v920
      %v946 = vmax.f32 %v922, 0.0
      %v947 = vmax.f32 %v923, 0.0
      %v948 = vmax.f32 %v924, 0.0
      %v949 = vmax.f32 %v925, 0.0
      %v950 = vmax.f32 %v926, 0.0
      %v951 = vmax.f32 %v927, 0.0
      %v952 = vmax.f32 %v928, 0.0
      %v953 = vmax.f32 %v929, 0.0
      %v954 = vmax.f32 %v930, 0.0
      %v955 = vmax.f32 %v931, 0.0
      %v956 = vmax.f32 %v932, 0.0
      %v957 = vmax.f32 %v933, 0.0
      %v958 = vmax.f32 %v934, 0.0
      %v959 = vmax.f32 %v935, 0.0
      %v960 = vmax.f32 %v936, 0.0
      %v961 = vmax.f32 %v937, 0.0
      %v962 = vmax.f32 %v938, 0.0
      %v963 = vmax.f32 %v939, 0.0
      %v964 = vmax.f32 %v940, 0.0
      %v965 = vmax.f32 %v941, 0.0
      %v966 = vmax.f32 %v942, 0.0
      %v967 = vmax.f32 %v943, 0.0
      %v968 = vmax.f32 %v944, 0.0
      %v969 = vmax.f32 %v945, 0.0
      %v970 = vpack.c.bf16 %v947, %v946
      %v971 = vpack.c.bf16 %v949, %v948
      %v972 = vpack.c.bf16 %v951, %v950
      %v973 = vpack.c.bf16 %v953, %v952
      %v974 = vpack.c.bf16 %v955, %v954
      %v975 = vpack.c.bf16 %v957, %v956
      %v976 = vpack.c.bf16 %v959, %v958
      %v977 = vpack.c.bf16 %v961, %v960
      %v978 = vpack.c.bf16 %v963, %v962
      %v979 = vpack.c.bf16 %v965, %v964
      %v980 = vpack.c.bf16 %v967, %v966
      %v981 = vpack.c.bf16 %v969, %v968
      %v982 = vld [vmem:[%s4] sm:$0xf]
      %v983 = vld [vmem:[%s4 + $0x4] sm:$0xf]
      %v984 = vld [vmem:[%s4 + $0x8] sm:$0xf]
      %v985 = vld [vmem:[%s4 + $0xc] sm:$0xf]
      %v986 = vld [vmem:[%s5] sm:$0x1]
      %v988 = vperm.slane %v986, 0
      %v994 = vunpack.c.l.b16 %v982
      %v995 = vunpack.c.l.b16 %v983
      %v996 = vunpack.c.l.b16 %v984
      %v997 = vunpack.c.l.b16 %v985
      %v998 = vpack.c.b16 %v995, %v994
      %v999 = vpack.c.b16 %v997, %v996
      %vm1002 = vcmask 261120
      %v1004 = vsel %vm1002, %v970, 0
      %v1007 = vsel %vm1002, %v971, 0
      %v1010 = vsel %vm1002, %v972, 0
      %v1013 = vsel %vm1002, %v973, 0
      %v1016 = vsel %vm1002, %v974, 0
      %v1019 = vsel %vm1002, %v975, 0
      %v1022 = vsel %vm1002, %v976, 0
      %v1025 = vsel %vm1002, %v977, 0
      %v1028 = vsel %vm1002, %v978, 0
      %v1031 = vsel %vm1002, %v979, 0
      %v1034 = vsel %vm1002, %v980, 0
      %v1037 = vsel %vm1002, %v981, 0
      %1039 = vmatpush.bf16.msra.mxu0 0
      %1040 = vmatpush.bf16.msra.mxu0 0
      %1041 = vmatpush.bf16.msra.mxu0 0
      %1042 = vmatpush.bf16.msra.mxu0 0
      %1043 = vmatpush.bf16.msra.mxu0 0
      %1044 = vmatpush.bf16.msra.mxu0 0
      %1045 = vmatpush.bf16.msra.mxu0 %v999
      %1046 = vmatpush.bf16.msra.mxu0 %v998
      %1047 = vmatmul.bf16.gmra.mxu0 %v1004
      %v1048 = vpop.f32.mrf.mxu0
      %v1049 = vadd.f32 %v988, %v1048
      %v1050 = vpop.f32.mrf.mxu0
      %v1051 = vadd.f32 %v988, %v1050
      %1052 = vmatmul.bf16.gmra.mxu0 %v1007
      %v1053 = vpop.f32.mrf.mxu0
      %v1054 = vadd.f32 %v988, %v1053
      %v1055 = vpop.f32.mrf.mxu0
      %v1056 = vadd.f32 %v988, %v1055
      %1057 = vmatmul.bf16.gmra.mxu0 %v1010
      %v1058 = vpop.f32.mrf.mxu0
      %v1059 = vadd.f32 %v988, %v1058
      %v1060 = vpop.f32.mrf.mxu0
      %v1061 = vadd.f32 %v988, %v1060
      %1062 = vmatmul.bf16.gmra.mxu0 %v1013
      %v1063 = vpop.f32.mrf.mxu0
      %v1064 = vadd.f32 %v988, %v1063
      %v1065 = vpop.f32.mrf.mxu0
      %v1066 = vadd.f32 %v988, %v1065
      %1067 = vmatmul.bf16.gmra.mxu0 %v1016
      %v1068 = vpop.f32.mrf.mxu0
      %v1069 = vadd.f32 %v988, %v1068
      %v1070 = vpop.f32.mrf.mxu0
      %v1071 = vadd.f32 %v988, %v1070
      %1072 = vmatmul.bf16.gmra.mxu0 %v1019
      %v1073 = vpop.f32.mrf.mxu0
      %v1074 = vadd.f32 %v988, %v1073
      %v1075 = vpop.f32.mrf.mxu0
      %v1076 = vadd.f32 %v988, %v1075
      %1077 = vmatmul.bf16.gmra.mxu0 %v1022
      %v1078 = vpop.f32.mrf.mxu0
      %v1079 = vadd.f32 %v988, %v1078
      %v1080 = vpop.f32.mrf.mxu0
      %v1081 = vadd.f32 %v988, %v1080
      %1082 = vmatmul.bf16.gmra.mxu0 %v1025
      %v1083 = vpop.f32.mrf.mxu0
      %v1084 = vadd.f32 %v988, %v1083
      %v1085 = vpop.f32.mrf.mxu0
      %v1086 = vadd.f32 %v988, %v1085
      %1087 = vmatmul.bf16.gmra.mxu0 %v1028
      %v1088 = vpop.f32.mrf.mxu0
      %v1089 = vadd.f32 %v988, %v1088
      %v1090 = vpop.f32.mrf.mxu0
      %v1091 = vadd.f32 %v988, %v1090
      %1092 = vmatmul.bf16.gmra.mxu0 %v1031
      %v1093 = vpop.f32.mrf.mxu0
      %v1094 = vadd.f32 %v988, %v1093
      %v1095 = vpop.f32.mrf.mxu0
      %v1096 = vadd.f32 %v988, %v1095
      %1097 = vmatmul.bf16.gmra.mxu0 %v1034
      %v1098 = vpop.f32.mrf.mxu0
      %v1099 = vadd.f32 %v988, %v1098
      %v1100 = vpop.f32.mrf.mxu0
      %v1101 = vadd.f32 %v988, %v1100
      %1102 = vmatmul.bf16.gmra.mxu0 %v1037
      %v1103 = vpop.f32.mrf.mxu0
      %v1104 = vadd.f32 %v988, %v1103
      %v1105 = vpop.f32.mrf.mxu0
      %v1106 = vadd.f32 %v988, %v1105
      %1107 = vdwg.mxu0
      %v1108 = vmax.f32 %v1049, 0.0
      %v1109 = vmax.f32 %v1051, 0.0
      %v1110 = vmax.f32 %v1054, 0.0
      %v1111 = vmax.f32 %v1056, 0.0
      %v1112 = vmax.f32 %v1059, 0.0
      %v1113 = vmax.f32 %v1061, 0.0
      %v1114 = vmax.f32 %v1064, 0.0
      %v1115 = vmax.f32 %v1066, 0.0
      %v1116 = vmax.f32 %v1069, 0.0
      %v1117 = vmax.f32 %v1071, 0.0
      %v1118 = vmax.f32 %v1074, 0.0
      %v1119 = vmax.f32 %v1076, 0.0
      %v1120 = vmax.f32 %v1079, 0.0
      %v1121 = vmax.f32 %v1081, 0.0
      %v1122 = vmax.f32 %v1084, 0.0
      %v1123 = vmax.f32 %v1086, 0.0
      %v1124 = vmax.f32 %v1089, 0.0
      %v1125 = vmax.f32 %v1091, 0.0
      %v1126 = vmax.f32 %v1094, 0.0
      %v1127 = vmax.f32 %v1096, 0.0
      %v1128 = vmax.f32 %v1099, 0.0
      %v1129 = vmax.f32 %v1101, 0.0
      %v1130 = vmax.f32 %v1104, 0.0
      %v1131 = vmax.f32 %v1106, 0.0
      %s1132 = smul.u32 %s27, 4
      %s1133 = ssub.s32 4, %s1132
      %p1134 = scmp.gt.s32.totalorder %s1133, 0
      %s1135 = scalar_select %p1134, %s1133, 0
      %s1136 = ssub.s32 12, %s1132
      %p1137 = scmp.lt.s32.totalorder %s1136, 12
      %s1138 = scalar_select %p1137, %s1136, 12
      %v1139 = vlaneseq
      %v1140 = vshrl.u32 %v1139, 7
      %v1141 = vadd.s32 %v1140, 8
      %v1142 = vadd.s32 %v1140, 16
      %v1143 = vadd.s32 %v1140, 24
      %v1144 = vadd.s32 %v1140, 32
      %v1145 = vadd.s32 %v1140, 40
      %v1146 = vadd.s32 %v1140, 48
      %v1147 = vadd.s32 %v1140, 56
      %v1148 = vadd.s32 %v1140, 64
      %v1149 = vadd.s32 %v1140, 72
      %v1150 = vadd.s32 %v1140, 80
      %v1151 = vadd.s32 %v1140, 88
      %v1152 = vadd.s32 %v1140, 96
      %v1153 = vadd.s32 %v1140, 104
      %v1154 = vadd.s32 %v1140, 112
      %v1155 = vadd.s32 %v1140, 120
      %v1156 = vadd.s32 %v1140, 128
      %v1157 = vadd.s32 %v1140, 136
      %v1158 = vadd.s32 %v1140, 144
      %v1159 = vadd.s32 %v1140, 152
      %v1160 = vadd.s32 %v1140, 160
      %v1161 = vadd.s32 %v1140, 168
      %v1162 = vadd.s32 %v1140, 176
      %v1163 = vadd.s32 %v1140, 184
      %s1164 = smul.u32 %s1135, 16
      %v1165 = vstv %s1164
      %vm1166 = vcmp.ge.s32.totalorder %v1140, %v1165
      %vm1167 = vcmp.ge.s32.totalorder %v1141, %v1165
      %vm1168 = vcmp.ge.s32.totalorder %v1142, %v1165
      %vm1169 = vcmp.ge.s32.totalorder %v1143, %v1165
      %vm1170 = vcmp.ge.s32.totalorder %v1144, %v1165
      %vm1171 = vcmp.ge.s32.totalorder %v1145, %v1165
      %vm1172 = vcmp.ge.s32.totalorder %v1146, %v1165
      %vm1173 = vcmp.ge.s32.totalorder %v1147, %v1165
      %vm1174 = vcmp.ge.s32.totalorder %v1148, %v1165
      %vm1175 = vcmp.ge.s32.totalorder %v1149, %v1165
      %vm1176 = vcmp.ge.s32.totalorder %v1150, %v1165
      %vm1177 = vcmp.ge.s32.totalorder %v1151, %v1165
      %vm1178 = vcmp.ge.s32.totalorder %v1152, %v1165
      %vm1179 = vcmp.ge.s32.totalorder %v1153, %v1165
      %vm1180 = vcmp.ge.s32.totalorder %v1154, %v1165
      %vm1181 = vcmp.ge.s32.totalorder %v1155, %v1165
      %vm1182 = vcmp.ge.s32.totalorder %v1156, %v1165
      %vm1183 = vcmp.ge.s32.totalorder %v1157, %v1165
      %vm1184 = vcmp.ge.s32.totalorder %v1158, %v1165
      %vm1185 = vcmp.ge.s32.totalorder %v1159, %v1165
      %vm1186 = vcmp.ge.s32.totalorder %v1160, %v1165
      %vm1187 = vcmp.ge.s32.totalorder %v1161, %v1165
      %vm1188 = vcmp.ge.s32.totalorder %v1162, %v1165
      %vm1189 = vcmp.ge.s32.totalorder %v1163, %v1165
      %s1190 = smul.u32 %s1138, 16
      %v1191 = vstv %s1190
      %vm1192 = vcmp.lt.s32.totalorder %v1140, %v1191
      %vm1193 = vcmp.lt.s32.totalorder %v1141, %v1191
      %vm1194 = vcmp.lt.s32.totalorder %v1142, %v1191
      %vm1195 = vcmp.lt.s32.totalorder %v1143, %v1191
      %vm1196 = vcmp.lt.s32.totalorder %v1144, %v1191
      %vm1197 = vcmp.lt.s32.totalorder %v1145, %v1191
      %vm1198 = vcmp.lt.s32.totalorder %v1146, %v1191
      %vm1199 = vcmp.lt.s32.totalorder %v1147, %v1191
      %vm1200 = vcmp.lt.s32.totalorder %v1148, %v1191
      %vm1201 = vcmp.lt.s32.totalorder %v1149, %v1191
      %vm1202 = vcmp.lt.s32.totalorder %v1150, %v1191
      %vm1203 = vcmp.lt.s32.totalorder %v1151, %v1191
      %vm1204 = vcmp.lt.s32.totalorder %v1152, %v1191
      %vm1205 = vcmp.lt.s32.totalorder %v1153, %v1191
      %vm1206 = vcmp.lt.s32.totalorder %v1154, %v1191
      %vm1207 = vcmp.lt.s32.totalorder %v1155, %v1191
      %vm1208 = vcmp.lt.s32.totalorder %v1156, %v1191
      %vm1209 = vcmp.lt.s32.totalorder %v1157, %v1191
      %vm1210 = vcmp.lt.s32.totalorder %v1158, %v1191
      %vm1211 = vcmp.lt.s32.totalorder %v1159, %v1191
      %vm1212 = vcmp.lt.s32.totalorder %v1160, %v1191
      %vm1213 = vcmp.lt.s32.totalorder %v1161, %v1191
      %vm1214 = vcmp.lt.s32.totalorder %v1162, %v1191
      %vm1215 = vcmp.lt.s32.totalorder %v1163, %v1191
      %vm1216 = vmand %vm1166, %vm1192
      %vm1217 = vmand %vm1167, %vm1193
      %vm1218 = vmand %vm1168, %vm1194
      %vm1219 = vmand %vm1169, %vm1195
      %vm1220 = vmand %vm1170, %vm1196
      %vm1221 = vmand %vm1171, %vm1197
      %vm1222 = vmand %vm1172, %vm1198
      %vm1223 = vmand %vm1173, %vm1199
      %vm1224 = vmand %vm1174, %vm1200
      %vm1225 = vmand %vm1175, %vm1201
      %vm1226 = vmand %vm1176, %vm1202
      %vm1227 = vmand %vm1177, %vm1203
      %vm1228 = vmand %vm1178, %vm1204
      %vm1229 = vmand %vm1179, %vm1205
      %vm1230 = vmand %vm1180, %vm1206
      %vm1231 = vmand %vm1181, %vm1207
      %vm1232 = vmand %vm1182, %vm1208
      %vm1233 = vmand %vm1183, %vm1209
      %vm1234 = vmand %vm1184, %vm1210
      %vm1235 = vmand %vm1185, %vm1211
      %vm1236 = vmand %vm1186, %vm1212
      %vm1237 = vmand %vm1187, %vm1213
      %vm1238 = vmand %vm1188, %vm1214
      %vm1239 = vmand %vm1189, %vm1215
      %v1240 = vsel %vm1216, 1, 0
      %v1241 = vsel %vm1217, 1, 0
      %v1242 = vsel %vm1218, 1, 0
      %v1243 = vsel %vm1219, 1, 0
      %v1244 = vsel %vm1220, 1, 0
      %v1245 = vsel %vm1221, 1, 0
      %v1246 = vsel %vm1222, 1, 0
      %v1247 = vsel %vm1223, 1, 0
      %v1248 = vsel %vm1224, 1, 0
      %v1249 = vsel %vm1225, 1, 0
      %v1250 = vsel %vm1226, 1, 0
      %v1251 = vsel %vm1227, 1, 0
      %v1252 = vsel %vm1228, 1, 0
      %v1253 = vsel %vm1229, 1, 0
      %v1254 = vsel %vm1230, 1, 0
      %v1255 = vsel %vm1231, 1, 0
      %v1256 = vsel %vm1232, 1, 0
      %v1257 = vsel %vm1233, 1, 0
      %v1258 = vsel %vm1234, 1, 0
      %v1259 = vsel %vm1235, 1, 0
      %v1260 = vsel %vm1236, 1, 0
      %v1261 = vsel %vm1237, 1, 0
      %v1262 = vsel %vm1238, 1, 0
      %v1263 = vsel %vm1239, 1, 0
      %vm1264 = vcmp.eq.s32.totalorder %v1240, 1
      %vm1265 = vcmp.eq.s32.totalorder %v1241, 1
      %vm1266 = vcmp.eq.s32.totalorder %v1242, 1
      %vm1267 = vcmp.eq.s32.totalorder %v1243, 1
      %vm1268 = vcmp.eq.s32.totalorder %v1244, 1
      %vm1269 = vcmp.eq.s32.totalorder %v1245, 1
      %vm1270 = vcmp.eq.s32.totalorder %v1246, 1
      %vm1271 = vcmp.eq.s32.totalorder %v1247, 1
      %vm1272 = vcmp.eq.s32.totalorder %v1248, 1
      %vm1273 = vcmp.eq.s32.totalorder %v1249, 1
      %vm1274 = vcmp.eq.s32.totalorder %v1250, 1
      %vm1275 = vcmp.eq.s32.totalorder %v1251, 1
      %vm1276 = vcmp.eq.s32.totalorder %v1252, 1
      %vm1277 = vcmp.eq.s32.totalorder %v1253, 1
      %vm1278 = vcmp.eq.s32.totalorder %v1254, 1
      %vm1279 = vcmp.eq.s32.totalorder %v1255, 1
      %vm1280 = vcmp.eq.s32.totalorder %v1256, 1
      %vm1281 = vcmp.eq.s32.totalorder %v1257, 1
      %vm1282 = vcmp.eq.s32.totalorder %v1258, 1
      %vm1283 = vcmp.eq.s32.totalorder %v1259, 1
      %vm1284 = vcmp.eq.s32.totalorder %v1260, 1
      %vm1285 = vcmp.eq.s32.totalorder %v1261, 1
      %vm1286 = vcmp.eq.s32.totalorder %v1262, 1
      %vm1287 = vcmp.eq.s32.totalorder %v1263, 1
      %v1288 = vsel %vm1264, %v1108, 0.0
      %v1289 = vsel %vm1265, %v1109, 0.0
      %v1290 = vsel %vm1266, %v1110, 0.0
      %v1291 = vsel %vm1267, %v1111, 0.0
      %v1292 = vsel %vm1268, %v1112, 0.0
      %v1293 = vsel %vm1269, %v1113, 0.0
      %v1294 = vsel %vm1270, %v1114, 0.0
      %v1295 = vsel %vm1271, %v1115, 0.0
      %v1296 = vsel %vm1272, %v1116, 0.0
      %v1297 = vsel %vm1273, %v1117, 0.0
      %v1298 = vsel %vm1274, %v1118, 0.0
      %v1299 = vsel %vm1275, %v1119, 0.0
      %v1300 = vsel %vm1276, %v1120, 0.0
      %v1301 = vsel %vm1277, %v1121, 0.0
      %v1302 = vsel %vm1278, %v1122, 0.0
      %v1303 = vsel %vm1279, %v1123, 0.0
      %v1304 = vsel %vm1280, %v1124, 0.0
      %v1305 = vsel %vm1281, %v1125, 0.0
      %v1306 = vsel %vm1282, %v1126, 0.0
      %v1307 = vsel %vm1283, %v1127, 0.0
      %v1308 = vsel %vm1284, %v1128, 0.0
      %v1309 = vsel %vm1285, %v1129, 0.0
      %v1310 = vsel %vm1286, %v1130, 0.0
      %v1311 = vsel %vm1287, %v1131, 0.0
      %v1312 = vpack.c.bf16 %v1288, %v1288
      %v1313 = vpack.c.bf16 %v1289, %v1289
      %v1314 = vpack.c.bf16 %v1290, %v1290
      %v1315 = vpack.c.bf16 %v1291, %v1291
      %v1316 = vpack.c.bf16 %v1292, %v1292
      %v1317 = vpack.c.bf16 %v1293, %v1293
      %v1318 = vpack.c.bf16 %v1294, %v1294
      %v1319 = vpack.c.bf16 %v1295, %v1295
      %v1320 = vpack.c.bf16 %v1296, %v1296
      %v1321 = vpack.c.bf16 %v1297, %v1297
      %v1322 = vpack.c.bf16 %v1298, %v1298
      %v1323 = vpack.c.bf16 %v1299, %v1299
      %v1324 = vpack.c.bf16 %v1300, %v1300
      %v1325 = vpack.c.bf16 %v1301, %v1301
      %v1326 = vpack.c.bf16 %v1302, %v1302
      %v1327 = vpack.c.bf16 %v1303, %v1303
      %v1328 = vpack.c.bf16 %v1304, %v1304
      %v1329 = vpack.c.bf16 %v1305, %v1305
      %v1330 = vpack.c.bf16 %v1306, %v1306
      %v1331 = vpack.c.bf16 %v1307, %v1307
      %v1332 = vpack.c.bf16 %v1308, %v1308
      %v1333 = vpack.c.bf16 %v1309, %v1309
      %v1334 = vpack.c.bf16 %v1310, %v1310
      %v1335 = vpack.c.bf16 %v1311, %v1311
      %v1344 = vunpack.c.l.b16 %v1312
      %v1345 = vunpack.c.l.b16 %v1313
      %v1346 = vunpack.c.l.b16 %v1314
      %v1347 = vunpack.c.l.b16 %v1315
      %v1348 = vunpack.c.l.b16 %v1316
      %v1349 = vunpack.c.l.b16 %v1317
      %v1350 = vunpack.c.l.b16 %v1318
      %v1351 = vunpack.c.l.b16 %v1319
      %v1352 = vpack.c.b16 %v1345, %v1344
      %v1353 = vpack.c.b16 %v1347, %v1346
      %v1354 = vpack.c.b16 %v1349, %v1348
      %v1355 = vpack.c.b16 %v1351, %v1350
      %v1358 = vunpack.c.l.b16 %v1320
      %v1359 = vunpack.c.l.b16 %v1321
      %v1360 = vpack.c.b16 %v1359, %v1358
      %1361 = vrot.lane.b32.xlu0 %v1353, 16
      %v1362 = vpop.permute.xlu0 %1361
      %1363 = vrot.lane.b32.xlu0 %v1354, 16
      %v1364 = vpop.permute.xlu0 %1363
      %1365 = vrot.lane.b32.xlu0 %v1355, 16
      %v1366 = vpop.permute.xlu0 %1365
      %1367 = vrot.lane.b32.xlu0 %v1360, 16
      %v1368 = vpop.permute.xlu0 %1367
      %v1371 = vunpack.c.l.b16 %v1322
      %v1372 = vunpack.c.l.b16 %v1323
      %v1373 = vpack.c.b16 %v1372, %v1371
      %1374 = vrot.lane.b32.xlu0 %v1354, 32
      %v1375 = vpop.permute.xlu0 %1374
      %1376 = vrot.lane.b32.xlu0 %v1355, 32
      %v1377 = vpop.permute.xlu0 %1376
      %1378 = vrot.lane.b32.xlu0 %v1360, 32
      %v1379 = vpop.permute.xlu0 %1378
      %1380 = vrot.lane.b32.xlu0 %v1373, 32
      %v1381 = vpop.permute.xlu0 %1380
      %v1384 = vunpack.c.l.b16 %v1324
      %v1385 = vunpack.c.l.b16 %v1325
      %v1386 = vpack.c.b16 %v1385, %v1384
      %1387 = vrot.lane.b32.xlu0 %v1355, 48
      %v1388 = vpop.permute.xlu0 %1387
      %1389 = vrot.lane.b32.xlu0 %v1360, 48
      %v1390 = vpop.permute.xlu0 %1389
      %1391 = vrot.lane.b32.xlu0 %v1373, 48
      %v1392 = vpop.permute.xlu0 %1391
      %1393 = vrot.lane.b32.xlu0 %v1386, 48
      %v1394 = vpop.permute.xlu0 %1393
      %v1397 = vunpack.c.l.b16 %v1326
      %v1398 = vunpack.c.l.b16 %v1327
      %v1399 = vpack.c.b16 %v1398, %v1397
      %1400 = vrot.lane.b32.xlu0 %v1360, 64
      %v1401 = vpop.permute.xlu0 %1400
      %1402 = vrot.lane.b32.xlu0 %v1373, 64
      %v1403 = vpop.permute.xlu0 %1402
      %1404 = vrot.lane.b32.xlu0 %v1386, 64
      %v1405 = vpop.permute.xlu0 %1404
      %1406 = vrot.lane.b32.xlu0 %v1399, 64
      %v1407 = vpop.permute.xlu0 %1406
      %v1410 = vunpack.c.l.b16 %v1328
      %v1411 = vunpack.c.l.b16 %v1329
      %v1412 = vpack.c.b16 %v1411, %v1410
      %1413 = vrot.lane.b32.xlu0 %v1373, 80
      %v1414 = vpop.permute.xlu0 %1413
      %1415 = vrot.lane.b32.xlu0 %v1386, 80
      %v1416 = vpop.permute.xlu0 %1415
      %1417 = vrot.lane.b32.xlu0 %v1399, 80
      %v1418 = vpop.permute.xlu0 %1417
      %1419 = vrot.lane.b32.xlu0 %v1412, 80
      %v1420 = vpop.permute.xlu0 %1419
      %v1423 = vunpack.c.l.b16 %v1330
      %v1424 = vunpack.c.l.b16 %v1331
      %v1425 = vpack.c.b16 %v1424, %v1423
      %1426 = vrot.lane.b32.xlu0 %v1386, 96
      %v1427 = vpop.permute.xlu0 %1426
      %1428 = vrot.lane.b32.xlu0 %v1399, 96
      %v1429 = vpop.permute.xlu0 %1428
      %1430 = vrot.lane.b32.xlu0 %v1412, 96
      %v1431 = vpop.permute.xlu0 %1430
      %1432 = vrot.lane.b32.xlu0 %v1425, 96
      %v1433 = vpop.permute.xlu0 %1432
      %v1436 = vunpack.c.l.b16 %v1332
      %v1437 = vunpack.c.l.b16 %v1333
      %v1438 = vpack.c.b16 %v1437, %v1436
      %1439 = vrot.lane.b32.xlu0 %v1399, 112
      %v1440 = vpop.permute.xlu0 %1439
      %1441 = vrot.lane.b32.xlu0 %v1412, 112
      %v1442 = vpop.permute.xlu0 %1441
      %1443 = vrot.lane.b32.xlu0 %v1425, 112
      %v1444 = vpop.permute.xlu0 %1443
      %1445 = vrot.lane.b32.xlu0 %v1438, 112
      %v1446 = vpop.permute.xlu0 %1445
      %v1449 = vunpack.c.l.b16 %v1334
      %v1450 = vunpack.c.l.b16 %v1335
      %v1451 = vpack.c.b16 %v1450, %v1449
      %v1454 = vsel %vm635, %v1352, %v1362
      %v1457 = vsel %vm635, %v1353, %v1364
      %v1460 = vsel %vm635, %v1354, %v1366
      %v1463 = vsel %vm635, %v1355, %v1368
      %v1465 = vsel %vm1002, %v1454, %v1375
      %v1467 = vsel %vm1002, %v1457, %v1377
      %v1469 = vsel %vm1002, %v1460, %v1379
      %v1471 = vsel %vm1002, %v1463, %v1381
      %vm1472 = vcmask 392192
      %v1474 = vsel %vm1472, %v1465, %v1388
      %v1476 = vsel %vm1472, %v1467, %v1390
      %v1478 = vsel %vm1472, %v1469, %v1392
      %v1480 = vsel %vm1472, %v1471, %v1394
      %vm1481 = vcmask 523264
      %v1483 = vsel %vm1481, %v1474, %v1401
      %v1485 = vsel %vm1481, %v1476, %v1403
      %v1487 = vsel %vm1481, %v1478, %v1405
      %v1489 = vsel %vm1481, %v1480, %v1407
      %vm1490 = vcmask 654336
      %v1492 = vsel %vm1490, %v1483, %v1414
      %v1494 = vsel %vm1490, %v1485, %v1416
      %v1496 = vsel %vm1490, %v1487, %v1418
      %v1498 = vsel %vm1490, %v1489, %v1420
      %vm1499 = vcmask 785408
      %v1501 = vsel %vm1499, %v1492, %v1427
      %v1503 = vsel %vm1499, %v1494, %v1429
      %v1505 = vsel %vm1499, %v1496, %v1431
      %v1507 = vsel %vm1499, %v1498, %v1433
      %vm1508 = vcmask 916480
      %v1510 = vsel %vm1508, %v1501, %v1440
      %v1513 = vsel %vm1508, %v1503, %v1442
      %v1516 = vsel %vm1508, %v1505, %v1444
      %v1519 = vsel %vm1508, %v1507, %v1446
      %v1521 = vld [vmem:[%s6] sm:$0xf]
      %v1522 = vld [vmem:[%s6 + $0x4] sm:$0xf]
      %v1523 = vld [vmem:[%s6 + $0x8] sm:$0xf]
      %v1524 = vld [vmem:[%s6 + $0xc] sm:$0xf]
      %v1525 = vld [vmem:[%s6 + $0x10] sm:$0xf]
      %v1526 = vld [vmem:[%s6 + $0x14] sm:$0xf]
      %v1527 = vld [vmem:[%s6 + $0x18] sm:$0xf]
      %v1528 = vld [vmem:[%s6 + $0x1c] sm:$0xf]
      %v1529 = vld [vmem:[%s6 + $0x20] sm:$0xf]
      %v1530 = vld [vmem:[%s6 + $0x24] sm:$0xf]
      %v1531 = vld [vmem:[%s6 + $0x28] sm:$0xf]
      %v1532 = vld [vmem:[%s6 + $0x2c] sm:$0xf]
      %v1533 = vld [vmem:[%s6 + $0x30] sm:$0xf]
      %v1534 = vld [vmem:[%s6 + $0x34] sm:$0xf]
      %v1535 = vld [vmem:[%s6 + $0x38] sm:$0xf]
      %v1536 = vld [vmem:[%s6 + $0x3c] sm:$0xf]
      %v1537 = vld [vmem:[%s6 + $0x40] sm:$0xf]
      %v1538 = vld [vmem:[%s6 + $0x44] sm:$0xf]
      %v1539 = vld [vmem:[%s7] sm:$0x1]
      %v1541 = vperm.slane %v1539, 0
      %v1561 = vunpack.c.l.b16 %v1521
      %v1562 = vunpack.c.l.b16 %v1522
      %v1563 = vunpack.c.l.b16 %v1523
      %v1564 = vunpack.c.l.b16 %v1524
      %v1565 = vunpack.c.l.b16 %v1525
      %v1566 = vunpack.c.l.b16 %v1526
      %v1567 = vunpack.c.l.b16 %v1527
      %v1568 = vunpack.c.l.b16 %v1528
      %v1569 = vunpack.c.l.b16 %v1529
      %v1570 = vunpack.c.l.b16 %v1530
      %v1571 = vunpack.c.l.b16 %v1531
      %v1572 = vunpack.c.l.b16 %v1532
      %v1573 = vunpack.c.l.b16 %v1533
      %v1574 = vunpack.c.l.b16 %v1534
      %v1575 = vunpack.c.l.b16 %v1535
      %v1576 = vunpack.c.l.b16 %v1536
      %v1577 = vunpack.c.l.b16 %v1537
      %v1578 = vunpack.c.l.b16 %v1538
      %v1579 = vpack.c.b16 %v1562, %v1561
      %v1580 = vpack.c.b16 %v1564, %v1563
      %v1581 = vpack.c.b16 %v1566, %v1565
      %v1582 = vpack.c.b16 %v1568, %v1567
      %v1583 = vpack.c.b16 %v1570, %v1569
      %v1584 = vpack.c.b16 %v1572, %v1571
      %v1585 = vpack.c.b16 %v1574, %v1573
      %v1586 = vpack.c.b16 %v1576, %v1575
      %v1587 = vpack.c.b16 %v1578, %v1577
      %v1598 = vsel %vm635, %v1412, 0
      %v1601 = vsel %vm635, %v1425, 0
      %v1604 = vsel %vm635, %v1438, 0
      %v1607 = vsel %vm635, %v1451, 0
      %1609 = vmatpush.bf16.msra.mxu0 %v1586
      %1610 = vmatpush.bf16.msra.mxu0 %v1585
      %1611 = vmatpush.bf16.msra.mxu0 %v1584
      %1612 = vmatpush.bf16.msra.mxu0 %v1583
      %1613 = vmatpush.bf16.msra.mxu0 %v1582
      %1614 = vmatpush.bf16.msra.mxu0 %v1581
      %1615 = vmatpush.bf16.msra.mxu0 %v1580
      %1616 = vmatpush.bf16.msra.mxu0 %v1579
      %1617 = vmatmul.bf16.gmra.mxu0 %v1510
      %v1618 = vpop.f32.mrf.mxu0
      %v1619 = vadd.f32 %v1541, %v1618
      %v1620 = vpop.f32.mrf.mxu0
      %v1621 = vadd.f32 %v1541, %v1620
      %1622 = vmatmul.bf16.gmra.mxu0 %v1513
      %v1623 = vpop.f32.mrf.mxu0
      %v1624 = vadd.f32 %v1541, %v1623
      %v1625 = vpop.f32.mrf.mxu0
      %v1626 = vadd.f32 %v1541, %v1625
      %1627 = vmatmul.bf16.gmra.mxu0 %v1516
      %v1628 = vpop.f32.mrf.mxu0
      %v1629 = vadd.f32 %v1541, %v1628
      %v1630 = vpop.f32.mrf.mxu0
      %v1631 = vadd.f32 %v1541, %v1630
      %1632 = vmatmul.bf16.gmra.mxu0 %v1519
      %v1633 = vpop.f32.mrf.mxu0
      %v1634 = vadd.f32 %v1541, %v1633
      %v1635 = vpop.f32.mrf.mxu0
      %v1636 = vadd.f32 %v1541, %v1635
      %1637 = vdwg.mxu0
      %1638 = vmatpush.bf16.msra.mxu0 0
      %1639 = vmatpush.bf16.msra.mxu0 0
      %1640 = vmatpush.bf16.msra.mxu0 0
      %1641 = vmatpush.bf16.msra.mxu0 0
      %1642 = vmatpush.bf16.msra.mxu0 0
      %1643 = vmatpush.bf16.msra.mxu0 0
      %1644 = vmatpush.bf16.msra.mxu0 0
      %1645 = vmatpush.bf16.msra.mxu0 %v1587
      %1646 = vmatmul.bf16.gmra.mxu0 %v1598
      %v1647 = vpop.f32.mrf.mxu0
      %v1648 = vadd.f32 %v1619, %v1647
      %v1649 = vpop.f32.mrf.mxu0
      %v1650 = vadd.f32 %v1621, %v1649
      %1651 = vmatmul.bf16.gmra.mxu0 %v1601
      %v1652 = vpop.f32.mrf.mxu0
      %v1653 = vadd.f32 %v1624, %v1652
      %v1654 = vpop.f32.mrf.mxu0
      %v1655 = vadd.f32 %v1626, %v1654
      %1656 = vmatmul.bf16.gmra.mxu0 %v1604
      %v1657 = vpop.f32.mrf.mxu0
      %v1658 = vadd.f32 %v1629, %v1657
      %v1659 = vpop.f32.mrf.mxu0
      %v1660 = vadd.f32 %v1631, %v1659
      %1661 = vmatmul.bf16.gmra.mxu0 %v1607
      %v1662 = vpop.f32.mrf.mxu0
      %v1663 = vadd.f32 %v1634, %v1662
      %v1664 = vpop.f32.mrf.mxu0
      %v1665 = vadd.f32 %v1636, %v1664
      %1666 = vdwg.mxu0
      %v1667 = vmax.f32 %v1648, 0.0
      %v1668 = vmax.f32 %v1650, 0.0
      %v1669 = vmax.f32 %v1653, 0.0
      %v1670 = vmax.f32 %v1655, 0.0
      %v1671 = vmax.f32 %v1658, 0.0
      %v1672 = vmax.f32 %v1660, 0.0
      %v1673 = vmax.f32 %v1663, 0.0
      %v1674 = vmax.f32 %v1665, 0.0
      %v1675 = vpack.c.bf16 %v1668, %v1667
      %v1676 = vpack.c.bf16 %v1670, %v1669
      %v1677 = vpack.c.bf16 %v1672, %v1671
      %v1678 = vpack.c.bf16 %v1674, %v1673
      %v1679 = vld [vmem:[%s8] sm:$0xf]
      %v1680 = vld [vmem:[%s8 + $0x4] sm:$0xf]
      %v1681 = vld [vmem:[%s9] sm:$0x1]
      %v1683 = vperm.slane %v1681, 0
      %v1687 = vunpack.c.l.b16 %v1679
      %v1688 = vunpack.c.l.b16 %v1680
      %v1689 = vpack.c.b16 %v1688, %v1687
      %v1692 = vsel %vm635, %v1675, 0
      %v1695 = vsel %vm635, %v1676, 0
      %v1698 = vsel %vm635, %v1677, 0
      %v1701 = vsel %vm635, %v1678, 0
      %1703 = vmatpush.bf16.msra.mxu0 0
      %1704 = vmatpush.bf16.msra.mxu0 0
      %1705 = vmatpush.bf16.msra.mxu0 0
      %1706 = vmatpush.bf16.msra.mxu0 0
      %1707 = vmatpush.bf16.msra.mxu0 0
      %1708 = vmatpush.bf16.msra.mxu0 0
      %1709 = vmatpush.bf16.msra.mxu0 0
      %1710 = vmatpush.bf16.msra.mxu0 %v1689
      %1711 = vmatmul.bf16.gmra.mxu0 %v1692
      %v1712 = vpop.f32.mrf.mxu0
      %v1713 = vadd.f32 %v1683, %v1712
      %v1714 = vpop.f32.mrf.mxu0
      %v1715 = vadd.f32 %v1683, %v1714
      %1716 = vmatmul.bf16.gmra.mxu0 %v1695
      %v1717 = vpop.f32.mrf.mxu0
      %v1718 = vadd.f32 %v1683, %v1717
      %v1719 = vpop.f32.mrf.mxu0
      %v1720 = vadd.f32 %v1683, %v1719
      %1721 = vmatmul.bf16.gmra.mxu0 %v1698
      %v1722 = vpop.f32.mrf.mxu0
      %v1723 = vadd.f32 %v1683, %v1722
      %v1724 = vpop.f32.mrf.mxu0
      %v1725 = vadd.f32 %v1683, %v1724
      %1726 = vmatmul.bf16.gmra.mxu0 %v1701
      %v1727 = vpop.f32.mrf.mxu0
      %v1728 = vadd.f32 %v1683, %v1727
      %v1729 = vpop.f32.mrf.mxu0
      %v1730 = vadd.f32 %v1683, %v1729
      %1731 = vdwg.mxu0
      %1740 = vrot.lane.b32.xlu0 %v625, 96
      %v1741 = vpop.permute.xlu0 %1740
      %1742 = vrot.lane.b32.xlu0 %v626, 96
      %v1743 = vpop.permute.xlu0 %1742
      %1744 = vrot.lane.b32.xlu0 %v627, 96
      %v1745 = vpop.permute.xlu0 %1744
      %1746 = vrot.lane.b32.xlu0 %v628, 96
      %v1747 = vpop.permute.xlu0 %1746
      %1748 = vrot.lane.b32.xlu0 %v629, 96
      %v1749 = vpop.permute.xlu0 %1748
      %1750 = vrot.lane.b32.xlu0 %v630, 96
      %v1751 = vpop.permute.xlu0 %1750
      %1752 = vrot.lane.b32.xlu0 %v631, 96
      %v1753 = vpop.permute.xlu0 %1752
      %1754 = vrot.lane.b32.xlu0 %v632, 96
      %v1755 = vpop.permute.xlu0 %1754
      %v1764 = vadd.f32 %v1713, %v1741
      %v1765 = vadd.f32 %v1715, %v1743
      %v1766 = vadd.f32 %v1718, %v1745
      %v1767 = vadd.f32 %v1720, %v1747
      %v1768 = vadd.f32 %v1723, %v1749
      %v1769 = vadd.f32 %v1725, %v1751
      %v1770 = vadd.f32 %v1728, %v1753
      %v1771 = vadd.f32 %v1730, %v1755
      %v1772 = vmax.f32 %v1764, 0.0
      %v1773 = vmax.f32 %v1765, 0.0
      %v1774 = vmax.f32 %v1766, 0.0
      %v1775 = vmax.f32 %v1767, 0.0
      %v1776 = vmax.f32 %v1768, 0.0
      %v1777 = vmax.f32 %v1769, 0.0
      %v1778 = vmax.f32 %v1770, 0.0
      %v1779 = vmax.f32 %v1771, 0.0
      %1780 = vst.msk [vmem:[%s422] sm:$0xff] %vm1002, %v1772
      %1781 = vst.msk [vmem:[%s422 + $0x8] sm:$0xff] %vm1002, %v1773
      %1782 = vst.msk [vmem:[%s422 + $0x10] sm:$0xff] %vm1002, %v1774
      %1783 = vst.msk [vmem:[%s422 + $0x18] sm:$0xff] %vm1002, %v1775
      %1784 = vst.msk [vmem:[%s422 + $0x20] sm:$0xff] %vm1002, %v1776
      %1785 = vst.msk [vmem:[%s422 + $0x28] sm:$0xff] %vm1002, %v1777
      %1786 = vst.msk [vmem:[%s422 + $0x30] sm:$0xff] %vm1002, %v1778
      %1787 = vst.msk [vmem:[%s422 + $0x38] sm:$0xff] %vm1002, %v1779
      %p1788 = scmp.lt.s32.totalorder %s26, 1
      %s1789 = scalar_select %p1788, %s26, 1
      %p1790 = scmp.lt.s32.totalorder %s27, 1
      %s1791 = scalar_select %p1790, %s27, 1
      %s1792 = smul.addr %s1791, 8
      %s1793 = smul.addr %s1789, 16
      %s1794 = sadd.s32 %s1792, %s1793
      %s1795 = smul.addr %s1794, 8
      %s1796 = scalar_lea.vmem %s11, %s1795
      // Predicated region
      $region65: #{tpu_custom_call.1} parent=63 // pred_check
        %p1797 = pneg %p292
      $region66: #{tpu_custom_call.1} parent=63 // pred_check_branch
        %1799 = sbr.rel (%p1797) target = $region68
      $region67: #{tpu_custom_call.1} parent=63 // pred_region
        _
      $region68: #{tpu_custom_call.1} parent=63 // pred_fallthru
        _
    $region64: #{tpu_custom_call.1} parent=5 // pred_fallthru
      _
    %p1800 = scmp.le.s32.totalorder 2, %s17
    // Predicated region
    $region69: #{tpu_custom_call.1} parent=5 // pred_check
      %p1801 = pneg %p1800
    $region70: #{tpu_custom_call.1} parent=5 // pred_check_branch
      %1803 = sbr.rel (%p1801) target = $region72
    $region71: #{tpu_custom_call.1} parent=5 // pred_region
      %s1804 = ssub.s32 %s17, 2
      // Predicated region
      $region73: #{tpu_custom_call.1} parent=71 // pred_check
        %p1805 = pneg %p298
      $region74: #{tpu_custom_call.1} parent=71 // pred_check_branch
        %1807 = sbr.rel (%p1805) target = $region76
      $region75: #{tpu_custom_call.1} parent=71 // pred_region
        %p1808 = scmp.lt.s32.totalorder %s28, 1
        %s1809 = scalar_select %p1808, %s28, 1
        %p1810 = scmp.lt.s32.totalorder %s29, 1
        %s1811 = scalar_select %p1810, %s29, 1
        %s1812 = smul.addr %s1811, 8
        %s1813 = smul.addr %s1809, 16
        %s1814 = sadd.s32 %s1812, %s1813
        %s1815 = smul.addr %s1814, 8
        %s1816 = scalar_lea.vmem %s11, %s1815
      $region76: #{tpu_custom_call.1} parent=71 // pred_fallthru
        _
    $region72: #{tpu_custom_call.1} parent=5 // pred_fallthru
      _
  $region6: #{tpu_custom_call.1} parent=0 // loop_footer
    %s21 = sadd.s32 1, %s17
  $region7: #{tpu_custom_call.1} parent=0 // loop_footer_branch
    %16 = sbr.rel target = $region3
  $region8: #{tpu_custom_call.1} parent=0 // loop_exit
    _

</llo_original>
